<compile_context>
chip_gen: v7x
topology: tpu7x:2x2x1
jax: 0.10.0
libtpu: 0.0.40
codegen_flags: <defaults>
</compile_context>

<pallas_src>
import jax
import jax.numpy as jnp
from jax.experimental import pallas as pl
from jax.experimental.pallas import tpu as pltpu


def _round_up(x, m):
    return ((x + m - 1) // m) * m


def _vmem_capacity_bytes(default_bytes=64 * 1024 * 1024):
    """Physical VMEM per TensorCore; 64 MiB fallback (v7x lower bound)."""
    try:
        info = pltpu.get_tpu_info()
        cap = getattr(info, "vmem_capacity_bytes", None)
        if cap:
            return int(cap)
    except Exception:
        pass
    return default_bytes


# ---------------------------------------------------------------------------
# Fused kernel: one grid step == one GCN layer
# ---------------------------------------------------------------------------
def _fused_gcn_kernel(a_hbm, x_hbm, w_ref, b_ref, o_ref, a_nrm_ref, sem):
    """a_hbm    : (Np, Np) cdt  raw adjacency, HBM (pl.ANY) — touched once
       x_hbm    : (Np, Fp) cdt  padded node features, HBM (pl.ANY) — touched once
       w_ref    : (Fp, Fp) cdt  this layer's zero-padded weight (pipelined)
       b_ref    : (1,  Fp) f32  this layer's zero-padded bias (pipelined)
       o_ref    : (Np, Fp) cdt  output block; VMEM-resident Z carrier (const idx)
       a_nrm_ref: (Np, Np) cdt  VMEM scratch — A_norm, resident all layers
       sem      : DMA semaphores (2,) for the layer-0 fetch of A and X
    """
    layer = pl.program_id(0)

    @pl.when(layer == 0)
    def _init():
        # One-shot: pull raw A into the A_norm scratch (normalized in place)
        # and seed the Z carrier (output block) with X.  Both DMAs overlap.
        cp_a = pltpu.make_async_copy(a_hbm, a_nrm_ref, sem.at[0])
        cp_x = pltpu.make_async_copy(x_hbm, o_ref, sem.at[1])
        cp_a.start()
        cp_x.start()
        cp_a.wait()
        cp_x.wait()

        # Adjacency normalization in f32 (exact math regardless of cdt).
        # TODO(synk): row-tile this init for very large N so the f32 temporaries
        # never hold several N^2 slabs at once (v7x 64 MiB sizing constraint).
        a = a_nrm_ref[...].astype(jnp.float32)
        npad = a.shape[0]
        row = jax.lax.broadcasted_iota(jnp.int32, (npad, npad), 0)
        col = jax.lax.broadcasted_iota(jnp.int32, (npad, npad), 1)
        a1 = jnp.where(row == col, jnp.float32(1.0), a)          # fill_diagonal_(1)

        d_inv = jax.lax.rsqrt(jnp.sum(a1, axis=1, keepdims=True))    # row degrees
        a_hat = a1 * d_inv * jnp.transpose(d_inv)                # D^-1/2 A D^-1/2

        # GCNConv(normalize=True) internal gcn_norm on the provided weights
        # (existing self-loop weights preserved; degrees from column scatter).
        d2_inv = jax.lax.rsqrt(jnp.sum(a_hat, axis=0, keepdims=True))
        a_norm = a_hat * jnp.transpose(d2_inv) * d2_inv

        a_nrm_ref[...] = a_norm.astype(a_nrm_ref.dtype)

    # --- one GCN layer: Z <- ReLU(A_norm @ (Z @ W) + b), f32 accumulation ----
    z = o_ref[...]
    zw = jnp.dot(z, w_ref[...], preferred_element_type=z.dtype)   # cdt out, f32 acc
    h = jnp.dot(a_nrm_ref[...], zw, preferred_element_type=jnp.float32)
    h = h + b_ref[...]                                            # (1, Fp) f32 bias
    o_ref[...] = jnp.maximum(h, jnp.float32(0.0)).astype(o_ref.dtype)


# ---------------------------------------------------------------------------
# Wrapper: pad, stack layer params, single pallas_call
# ---------------------------------------------------------------------------
def gcn_encoder_forward(features, graph, params, *,
                        compute_dtype=jnp.bfloat16, mxu_k_align=None):
    n, f_in = features.shape
    assert graph.shape == (n, n)
    n_layers = len(params)
    latent_dim = params[-1][0].shape[1]
    cdt = jnp.dtype(compute_dtype)
    itm = cdt.itemsize

    # Lane alignment for the feature dim: 128, or 256 once real widths reach 128
    # (v6e/v7x MXU contracts 256 deep).  v5e callers should pass mxu_k_align=128.
    dims = [f_in] + [w.shape[1] for w, _ in params]
    if mxu_k_align is None:
        mxu_k_align = 256 if max(dims) >= 128 else 128
    f_pad = _round_up(max(dims), mxu_k_align)
    # Sublane-pad node count to the native tile (f32: 8, bf16: 16).
    n_pad = _round_up(n, 8 * (4 // itm))

    # Zero-pad + stack per-layer parameters: (L, Fp, Fp) and (L, 1, Fp).
    w_stack = jnp.zeros((n_layers, f_pad, f_pad), cdt)
    b_stack = jnp.zeros((n_layers, 1, f_pad), jnp.float32)
    for i, (w, b) in enumerate(params):
        w_stack = w_stack.at[i, : w.shape[0], : w.shape[1]].set(w.astype(cdt))
        b_stack = b_stack.at[i, 0, : b.shape[0]].set(b.astype(jnp.float32))

    # Raw adjacency / features stay in HBM (pl.ANY); 0/1 adjacency is exact in bf16.
    x = jnp.zeros((n_pad, f_pad), cdt).at[:n, :f_in].set(features.astype(cdt))
    a = jnp.zeros((n_pad, n_pad), cdt).at[:n, :n].set(graph.astype(cdt))

    # VMEM budget: A_norm scratch + Z/output (allow 2 bufs) + double-buffered W/b,
    # plus the larger of the one-shot init f32 temporaries or per-layer matmul temps.
    steady = (n_pad * n_pad * itm
              + 2 * n_pad * f_pad * itm
              + 2 * f_pad * f_pad * itm
              + 2 * 8 * f_pad * 4)
    init_spike = 4 * n_pad * n_pad * 4
    layer_tmp = 2 * n_pad * f_pad * 4
    vmem_needed = steady + max(init_spike, layer_tmp)
    vmem_cap = _vmem_capacity_bytes()
    vmem_limit = int(min(max(32 * 1024 * 1024, int(1.25 * vmem_needed)),
                         int(0.9 * vmem_cap)))

    cost = pl.CostEstimate(
        flops=int(n_layers * (2 * n_pad * f_pad * f_pad
                              + 2 * n_pad * n_pad * f_pad) + 8 * n_pad * n_pad),
        transcendentals=int(2 * n_pad),
        bytes_accessed=int(a.size * itm + x.size * itm + w_stack.size * itm
                           + b_stack.size * 4 + n_pad * f_pad * itm),
    )

    def _build(out_pipeline_mode):
        out_kwargs = {}
        if out_pipeline_mode is not None:
            out_kwargs["pipeline_mode"] = out_pipeline_mode
        grid_spec = pltpu.PrefetchScalarGridSpec(
            num_scalar_prefetch=0,
            grid=(n_layers,),                 # layer loop; inherently sequential
            in_specs=[
                pl.BlockSpec(memory_space=pl.ANY),                        # A (HBM)
                pl.BlockSpec(memory_space=pl.ANY),                        # X (HBM)
                pl.BlockSpec((None, f_pad, f_pad), lambda l: (l, 0, 0)),  # W_l
                pl.BlockSpec((None, 1, f_pad), lambda l: (l, 0, 0)),      # b_l
            ],
            # Constant-index output block == VMEM-resident Z carrier.
            out_specs=pl.BlockSpec((n_pad, f_pad), lambda l: (0, 0), **out_kwargs),
            scratch_shapes=[
                pltpu.VMEM((n_pad, n_pad), cdt),      # A_norm, resident all layers
                pltpu.SemaphoreType.DMA((2,)),        # layer-0 A/X fetch
            ],
        )
        return pl.pallas_call(
            _fused_gcn_kernel,
            out_shape=jax.ShapeDtypeStruct((n_pad, f_pad), cdt),
            grid_spec=grid_spec,
            compiler_params=pltpu.CompilerParams(
                dimension_semantics=("arbitrary",),
                vmem_limit_bytes=vmem_limit,
            ),
            cost_estimate=cost,
        )

    try:
        # Single-buffer the constant-index output block (it never re-DMAs).
        out = _build(pl.Buffered(1))(a, x, w_stack, b_stack)
    except Exception:
        # Fallback for jax builds without pipeline_mode / Buffered(1) support.
        out = _build(None)(a, x, w_stack, b_stack)

    return out[:n, :latent_dim].astype(jnp.float32)


# ---------------------------------------------------------------------------
# Deterministic parameter init (glorot-uniform weights, zero bias — PyG default)
# ---------------------------------------------------------------------------
def init_params(key, input_dim, hidden_dims, latent_dim):
    dims = [input_dim] + list(hidden_dims) + [latent_dim]
    params = []
    for i in range(len(dims) - 1):
        key, sub = jax.random.split(key)
        fan_in, fan_out = dims[i], dims[i + 1]
        limit = (6.0 / (fan_in + fan_out)) ** 0.5
        w = jax.random.uniform(sub, (fan_in, fan_out), jnp.float32, -limit, limit)
        b = jnp.zeros((fan_out,), jnp.float32)
        params.append((w, b))
    return params


# Pure-JAX reference for the sanity check
def _reference(features, graph, params):
    n = graph.shape[0]
    a1 = graph.at[jnp.arange(n), jnp.arange(n)].set(1.0)
    d = jnp.sum(a1, axis=1)
    dinv = d ** -0.5
    a_hat = a1 * dinv[:, None] * dinv[None, :]
    d2 = jnp.sum(a_hat, axis=0)
    dinv2 = d2 ** -0.5
    a_norm = a_hat * dinv2[:, None] * dinv2[None, :]
    z = features
    for w, b in params:
        z = jnp.maximum(a_norm @ z @ w + b[None, :], 0.0)
    return z


if __name__ == "__main__":
    # Small, module-consistent shapes.
    N = 16            # number of graph nodes
    input_dim = 8
    hidden_dims = [32, 16]
    latent_dim = 8

    key = jax.random.PRNGKey(0)
    k_feat, k_adj, k_par = jax.random.split(key, 3)

    features = jax.random.normal(k_feat, (N, input_dim), jnp.float32)
    # Random symmetric 0/1 adjacency (diagonal overwritten to 1 in-kernel).
    upper = (jax.random.uniform(k_adj, (N, N)) < 0.3).astype(jnp.float32)
    graph = jnp.maximum(upper, upper.T)

    params = init_params(k_par, input_dim, hidden_dims, latent_dim)
    z_ref = _reference(features, graph, params)

    # Exact path: f32 MXU operands — strict check.
    z32 = gcn_encoder_forward(features, graph, params,
                              compute_dtype=jnp.float32)
    z32 = jax.block_until_ready(z32)
    assert z32.shape == (N, latent_dim)
    assert bool(jnp.allclose(z32, z_ref, atol=1e-5, rtol=1e-5)), \
        "f32 kernel mismatch vs reference"

    # Fast path (all generations): bf16 MXU operands, f32 accumulation.
    z16 = gcn_encoder_forward(features, graph, params,
                              compute_dtype=jnp.bfloat16)
    z16 = jax.block_until_ready(z16)
    assert z16.shape == (N, latent_dim)
    assert bool(jnp.allclose(z16, z_ref, atol=1e-1, rtol=1e-1)), \
        "bf16 kernel mismatch vs reference"

    print("KERNEL_OK")
</pallas_src>

<mosaic_0001>
module attributes {stable_mosaic.version = 11 : i64} {
  func.func @_fused_gcn_kernel(%arg0: i32, %arg1: memref<16x16xf32, #tpu.memory_space<any>>, %arg2: memref<16x128xf32, #tpu.memory_space<any>>, %arg3: memref<1x128x128xf32, #tpu.memory_space<vmem>>, %arg4: memref<1x1x128xf32, #tpu.memory_space<vmem>>, %arg5: memref<16x128xf32, #tpu.memory_space<vmem>>, %arg6: memref<16x16xf32, #tpu.memory_space<vmem>>, %arg7: memref<2x!tpu.dma_semaphore, #tpu.memory_space<semaphore_mem>>) attributes {dimension_semantics = [#tpu.dimension_semantics<arbitrary>], iteration_bounds = array<i64: 3>, scalar_prefetch = 0 : i64, scratch_operands = 2 : i64, tpu.core_type = #tpu.core_type<tc>, window_params = [{}, {}, {transform_indices = @transform_2, window_bounds = array<i64: 1, 128, 128>}, {transform_indices = @transform_3, window_bounds = array<i64: 1, 1, 128>}, {pipeline_mode = #tpu.pipeline_mode<synchronous>, transform_indices = @transform_4, window_bounds = array<i64: 16, 128>}]} {
    %c0_i32 = arith.constant 0 : i32
    %0 = arith.cmpi eq, %arg0, %c0_i32 : i32
    %1 = arith.extui %0 : i1 to i32
    %c0_i32_0 = arith.constant 0 : i32
    %2 = arith.cmpi ne, %1, %c0_i32_0 : i32
    scf.if %2 {
      %c0_i32_14 = arith.constant 0 : i32
      %16 = tpu.memref_slice %arg7[%c0_i32_14] : memref<2x!tpu.dma_semaphore, #tpu.memory_space<semaphore_mem>> -> memref<1x!tpu.dma_semaphore, #tpu.memory_space<semaphore_mem>>
      %17 = tpu.memref_squeeze %16 : memref<1x!tpu.dma_semaphore, #tpu.memory_space<semaphore_mem>> -> memref<!tpu.dma_semaphore, #tpu.memory_space<semaphore_mem>>
      tpu.enqueue_dma source(%arg1 : memref<16x16xf32, #tpu.memory_space<any>>) target(%arg6 : memref<16x16xf32, #tpu.memory_space<vmem>>) target_semaphore(%17 : memref<!tpu.dma_semaphore, #tpu.memory_space<semaphore_mem>>)
      %c1_i32 = arith.constant 1 : i32
      %18 = tpu.memref_slice %arg7[%c1_i32] : memref<2x!tpu.dma_semaphore, #tpu.memory_space<semaphore_mem>> -> memref<1x!tpu.dma_semaphore, #tpu.memory_space<semaphore_mem>>
      %19 = tpu.memref_squeeze %18 : memref<1x!tpu.dma_semaphore, #tpu.memory_space<semaphore_mem>> -> memref<!tpu.dma_semaphore, #tpu.memory_space<semaphore_mem>>
      tpu.enqueue_dma source(%arg2 : memref<16x128xf32, #tpu.memory_space<any>>) target(%arg5 : memref<16x128xf32, #tpu.memory_space<vmem>>) target_semaphore(%19 : memref<!tpu.dma_semaphore, #tpu.memory_space<semaphore_mem>>)
      %c0_i32_15 = arith.constant 0 : i32
      %20 = tpu.memref_slice %arg7[%c0_i32_15] : memref<2x!tpu.dma_semaphore, #tpu.memory_space<semaphore_mem>> -> memref<1x!tpu.dma_semaphore, #tpu.memory_space<semaphore_mem>>
      %21 = tpu.memref_squeeze %20 : memref<1x!tpu.dma_semaphore, #tpu.memory_space<semaphore_mem>> -> memref<!tpu.dma_semaphore, #tpu.memory_space<semaphore_mem>>
      tpu.wait_dma2 semaphore(%21 : memref<!tpu.dma_semaphore, #tpu.memory_space<semaphore_mem>>) src(%arg1 : memref<16x16xf32, #tpu.memory_space<any>>) dst(%arg6 : memref<16x16xf32, #tpu.memory_space<vmem>>)
      %c1_i32_16 = arith.constant 1 : i32
      %22 = tpu.memref_slice %arg7[%c1_i32_16] : memref<2x!tpu.dma_semaphore, #tpu.memory_space<semaphore_mem>> -> memref<1x!tpu.dma_semaphore, #tpu.memory_space<semaphore_mem>>
      %23 = tpu.memref_squeeze %22 : memref<1x!tpu.dma_semaphore, #tpu.memory_space<semaphore_mem>> -> memref<!tpu.dma_semaphore, #tpu.memory_space<semaphore_mem>>
      tpu.wait_dma2 semaphore(%23 : memref<!tpu.dma_semaphore, #tpu.memory_space<semaphore_mem>>) src(%arg2 : memref<16x128xf32, #tpu.memory_space<any>>) dst(%arg5 : memref<16x128xf32, #tpu.memory_space<vmem>>)
      %c0_17 = arith.constant 0 : index
      %c0_18 = arith.constant 0 : index
      %24 = vector.load %arg6[%c0_17, %c0_18] : memref<16x16xf32, #tpu.memory_space<vmem>>, vector<16x16xf32>
      %25 = tpu.iota {dimensions = array<i32: 0>} : vector<16x16xi32>
      %26 = tpu.iota {dimensions = array<i32: 1>} : vector<16x16xi32>
      %27 = arith.cmpi eq, %25, %26 : vector<16x16xi32>
      %cst_19 = arith.constant 1.000000e+00 : f32
      %28 = vector.broadcast %cst_19 : f32 to vector<16x16xf32>
      %29 = arith.select %27, %28, %24 : vector<16x16xi1>, vector<16x16xf32>
      %cst_20 = arith.constant dense<0.000000e+00> : vector<16xf32>
      %30 = vector.multi_reduction <add>, %29, %cst_20 [1] : vector<16x16xf32> to vector<16xf32>
      %31 = vector.shape_cast %30 : vector<16xf32> to vector<16x1xf32>
      %32 = math.rsqrt %31 : vector<16x1xf32>
      %33 = vector.broadcast %32 : vector<16x1xf32> to vector<16x16xf32>
      %34 = arith.mulf %29, %33 : vector<16x16xf32>
      %35 = tpu.transpose %32, [1, 0] : vector<16x1xf32> -> vector<1x16xf32>
      %36 = vector.broadcast %35 : vector<1x16xf32> to vector<16x16xf32>
      %37 = arith.mulf %34, %36 : vector<16x16xf32>
      %cst_21 = arith.constant dense<0.000000e+00> : vector<16xf32>
      %38 = vector.multi_reduction <add>, %37, %cst_21 [0] : vector<16x16xf32> to vector<16xf32>
      %39 = vector.shape_cast %38 : vector<16xf32> to vector<1x16xf32>
      %40 = math.rsqrt %39 : vector<1x16xf32>
      %41 = tpu.transpose %40, [1, 0] : vector<1x16xf32> -> vector<16x1xf32>
      %42 = vector.broadcast %41 : vector<16x1xf32> to vector<16x16xf32>
      %43 = arith.mulf %37, %42 : vector<16x16xf32>
      %44 = vector.broadcast %40 : vector<1x16xf32> to vector<16x16xf32>
      %45 = arith.mulf %43, %44 : vector<16x16xf32>
      %c0_22 = arith.constant 0 : index
      %c0_23 = arith.constant 0 : index
      %46 = vector.load %arg6[%c0_22, %c0_23] : memref<16x16xf32, #tpu.memory_space<vmem>>, vector<16x16xf32>
      tpu.vector_store %arg6[%c0_22, %c0_23], %45 {strides = array<i32>} : memref<16x16xf32, #tpu.memory_space<vmem>>, vector<16x16xf32>,
    } else {
    }
    %c0 = arith.constant 0 : index
    %c0_1 = arith.constant 0 : index
    %3 = vector.load %arg5[%c0, %c0_1] : memref<16x128xf32, #tpu.memory_space<vmem>>, vector<16x128xf32>
    %c0_2 = arith.constant 0 : index
    %c0_3 = arith.constant 0 : index
    %c0_4 = arith.constant 0 : index
    %4 = vector.load %arg3[%c0_2, %c0_3, %c0_4] : memref<1x128x128xf32, #tpu.memory_space<vmem>>, vector<1x128x128xf32>
    %5 = vector.shape_cast %4 : vector<1x128x128xf32> to vector<128x128xf32>
    %cst = arith.constant dense<0.000000e+00> : vector<16x128xf32>
    %6 = tpu.matmul %3, %5, %cst {dimension_numbers = #tpu.dot_dimension_numbers<[1], [0], [0], [1], [0, 0, 1, 1], [], []>} : vector<16x128xf32>, vector<128x128xf32>, vector<16x128xf32> -> vector<16x128xf32>
    %c0_5 = arith.constant 0 : index
    %c0_6 = arith.constant 0 : index
    %7 = vector.load %arg6[%c0_5, %c0_6] : memref<16x16xf32, #tpu.memory_space<vmem>>, vector<16x16xf32>
    %cst_7 = arith.constant dense<0.000000e+00> : vector<16x128xf32>
    %8 = tpu.matmul %7, %6, %cst_7 {dimension_numbers = #tpu.dot_dimension_numbers<[1], [0], [0], [1], [0, 0, 1, 1], [], []>} : vector<16x16xf32>, vector<16x128xf32>, vector<16x128xf32> -> vector<16x128xf32>
    %c0_8 = arith.constant 0 : index
    %c0_9 = arith.constant 0 : index
    %c0_10 = arith.constant 0 : index
    %9 = vector.load %arg4[%c0_8, %c0_9, %c0_10] : memref<1x1x128xf32, #tpu.memory_space<vmem>>, vector<1x1x128xf32>
    %10 = vector.shape_cast %9 : vector<1x1x128xf32> to vector<1x128xf32>
    %11 = vector.broadcast %10 : vector<1x128xf32> to vector<16x128xf32>
    %12 = arith.addf %8, %11 : vector<16x128xf32>
    %cst_11 = arith.constant 0.000000e+00 : f32
    %13 = vector.broadcast %cst_11 : f32 to vector<16x128xf32>
    %14 = arith.maximumf %12, %13 : vector<16x128xf32>
    %c0_12 = arith.constant 0 : index
    %c0_13 = arith.constant 0 : index
    %15 = vector.load %arg5[%c0_12, %c0_13] : memref<16x128xf32, #tpu.memory_space<vmem>>, vector<16x128xf32>
    tpu.vector_store %arg5[%c0_12, %c0_13], %14 {strides = array<i32>} : memref<16x128xf32, #tpu.memory_space<vmem>>, vector<16x128xf32>,
    return
  }
  func.func @transform_2(%arg0: i32) -> (i32, i32, i32) {
    %c0_i32 = arith.constant 0 : i32
    %c0_i32_0 = arith.constant 0 : i32
    %c0_i32_1 = arith.constant 0 : i32
    return %arg0, %c0_i32, %c0_i32_0 : i32, i32, i32
  }
  func.func @transform_3(%arg0: i32) -> (i32, i32, i32) {
    %c0_i32 = arith.constant 0 : i32
    %c0_i32_0 = arith.constant 0 : i32
    %c0_i32_1 = arith.constant 0 : i32
    return %arg0, %c0_i32, %c0_i32_0 : i32, i32, i32
  }
  func.func @transform_4(%arg0: i32) -> (i32, i32) {
    %c0_i32 = arith.constant 0 : i32
    %c0_i32_0 = arith.constant 0 : i32
    %c0_i32_1 = arith.constant 0 : i32
    return %c0_i32, %c0_i32_0 : i32, i32
  }
}

module attributes {stable_mosaic.version = 11 : i64} {
  func.func @_fused_gcn_kernel(%arg0: i32, %arg1: memref<16x16xf32, #tpu.memory_space<any>>, %arg2: memref<16x128xf32, #tpu.memory_space<any>>, %arg3: memref<1x128x128xf32, #tpu.memory_space<vmem>>, %arg4: memref<1x1x128xf32, #tpu.memory_space<vmem>>, %arg5: memref<16x128xf32, #tpu.memory_space<vmem>>, %arg6: memref<16x16xf32, #tpu.memory_space<vmem>>, %arg7: memref<2x!tpu.dma_semaphore, #tpu.memory_space<semaphore_mem>>) attributes {dimension_semantics = [#tpu.dimension_semantics<arbitrary>], iteration_bounds = array<i64: 3>, scalar_prefetch = 0 : i64, scratch_operands = 2 : i64, tpu.core_type = #tpu.core_type<tc>, window_params = [{}, {}, {transform_indices = @transform_2, window_bounds = array<i64: 1, 128, 128>}, {transform_indices = @transform_3, window_bounds = array<i64: 1, 1, 128>}, {pipeline_mode = #tpu.pipeline_mode<synchronous>, transform_indices = @transform_4, window_bounds = array<i64: 16, 128>}]} {
    %c0_i32 = arith.constant 0 : i32
    %0 = arith.cmpi eq, %arg0, %c0_i32 : i32
    %1 = arith.extui %0 : i1 to i32
    %c0_i32_0 = arith.constant 0 : i32
    %2 = arith.cmpi ne, %1, %c0_i32_0 : i32
    scf.if %2 {
      %c0_i32_14 = arith.constant 0 : i32
      %16 = tpu.memref_slice %arg7[%c0_i32_14] : memref<2x!tpu.dma_semaphore, #tpu.memory_space<semaphore_mem>> -> memref<1x!tpu.dma_semaphore, #tpu.memory_space<semaphore_mem>>
      %17 = tpu.memref_squeeze %16 : memref<1x!tpu.dma_semaphore, #tpu.memory_space<semaphore_mem>> -> memref<!tpu.dma_semaphore, #tpu.memory_space<semaphore_mem>>
      tpu.enqueue_dma source(%arg1 : memref<16x16xf32, #tpu.memory_space<any>>) target(%arg6 : memref<16x16xf32, #tpu.memory_space<vmem>>) target_semaphore(%17 : memref<!tpu.dma_semaphore, #tpu.memory_space<semaphore_mem>>)
      %c1_i32 = arith.constant 1 : i32
      %18 = tpu.memref_slice %arg7[%c1_i32] : memref<2x!tpu.dma_semaphore, #tpu.memory_space<semaphore_mem>> -> memref<1x!tpu.dma_semaphore, #tpu.memory_space<semaphore_mem>>
      %19 = tpu.memref_squeeze %18 : memref<1x!tpu.dma_semaphore, #tpu.memory_space<semaphore_mem>> -> memref<!tpu.dma_semaphore, #tpu.memory_space<semaphore_mem>>
      tpu.enqueue_dma source(%arg2 : memref<16x128xf32, #tpu.memory_space<any>>) target(%arg5 : memref<16x128xf32, #tpu.memory_space<vmem>>) target_semaphore(%19 : memref<!tpu.dma_semaphore, #tpu.memory_space<semaphore_mem>>)
      %c0_i32_15 = arith.constant 0 : i32
      %20 = tpu.memref_slice %arg7[%c0_i32_15] : memref<2x!tpu.dma_semaphore, #tpu.memory_space<semaphore_mem>> -> memref<1x!tpu.dma_semaphore, #tpu.memory_space<semaphore_mem>>
      %21 = tpu.memref_squeeze %20 : memref<1x!tpu.dma_semaphore, #tpu.memory_space<semaphore_mem>> -> memref<!tpu.dma_semaphore, #tpu.memory_space<semaphore_mem>>
      tpu.wait_dma2 semaphore(%21 : memref<!tpu.dma_semaphore, #tpu.memory_space<semaphore_mem>>) src(%arg1 : memref<16x16xf32, #tpu.memory_space<any>>) dst(%arg6 : memref<16x16xf32, #tpu.memory_space<vmem>>)
      %c1_i32_16 = arith.constant 1 : i32
      %22 = tpu.memref_slice %arg7[%c1_i32_16] : memref<2x!tpu.dma_semaphore, #tpu.memory_space<semaphore_mem>> -> memref<1x!tpu.dma_semaphore, #tpu.memory_space<semaphore_mem>>
      %23 = tpu.memref_squeeze %22 : memref<1x!tpu.dma_semaphore, #tpu.memory_space<semaphore_mem>> -> memref<!tpu.dma_semaphore, #tpu.memory_space<semaphore_mem>>
      tpu.wait_dma2 semaphore(%23 : memref<!tpu.dma_semaphore, #tpu.memory_space<semaphore_mem>>) src(%arg2 : memref<16x128xf32, #tpu.memory_space<any>>) dst(%arg5 : memref<16x128xf32, #tpu.memory_space<vmem>>)
      %c0_17 = arith.constant 0 : index
      %c0_18 = arith.constant 0 : index
      %24 = vector.load %arg6[%c0_17, %c0_18] : memref<16x16xf32, #tpu.memory_space<vmem>>, vector<16x16xf32>
      %25 = tpu.iota {dimensions = array<i32: 0>} : vector<16x16xi32>
      %26 = tpu.iota {dimensions = array<i32: 1>} : vector<16x16xi32>
      %27 = arith.cmpi eq, %25, %26 : vector<16x16xi32>
      %cst_19 = arith.constant 1.000000e+00 : f32
      %28 = vector.broadcast %cst_19 : f32 to vector<16x16xf32>
      %29 = arith.select %27, %28, %24 : vector<16x16xi1>, vector<16x16xf32>
      %cst_20 = arith.constant dense<0.000000e+00> : vector<16xf32>
      %30 = vector.multi_reduction <add>, %29, %cst_20 [1] : vector<16x16xf32> to vector<16xf32>
      %31 = vector.shape_cast %30 : vector<16xf32> to vector<16x1xf32>
      %32 = math.rsqrt %31 : vector<16x1xf32>
      %33 = vector.broadcast %32 : vector<16x1xf32> to vector<16x16xf32>
      %34 = arith.mulf %29, %33 : vector<16x16xf32>
      %35 = tpu.transpose %32, [1, 0] : vector<16x1xf32> -> vector<1x16xf32>
      %36 = vector.broadcast %35 : vector<1x16xf32> to vector<16x16xf32>
      %37 = arith.mulf %34, %36 : vector<16x16xf32>
      %cst_21 = arith.constant dense<0.000000e+00> : vector<16xf32>
      %38 = vector.multi_reduction <add>, %37, %cst_21 [0] : vector<16x16xf32> to vector<16xf32>
      %39 = vector.shape_cast %38 : vector<16xf32> to vector<1x16xf32>
      %40 = math.rsqrt %39 : vector<1x16xf32>
      %41 = tpu.transpose %40, [1, 0] : vector<1x16xf32> -> vector<16x1xf32>
      %42 = vector.broadcast %41 : vector<16x1xf32> to vector<16x16xf32>
      %43 = arith.mulf %37, %42 : vector<16x16xf32>
      %44 = vector.broadcast %40 : vector<1x16xf32> to vector<16x16xf32>
      %45 = arith.mulf %43, %44 : vector<16x16xf32>
      %c0_22 = arith.constant 0 : index
      %c0_23 = arith.constant 0 : index
      %46 = vector.load %arg6[%c0_22, %c0_23] : memref<16x16xf32, #tpu.memory_space<vmem>>, vector<16x16xf32>
      tpu.vector_store %arg6[%c0_22, %c0_23], %45 {strides = array<i32>} : memref<16x16xf32, #tpu.memory_space<vmem>>, vector<16x16xf32>,
    } else {
    }
    %c0 = arith.constant 0 : index
    %c0_1 = arith.constant 0 : index
    %3 = vector.load %arg5[%c0, %c0_1] : memref<16x128xf32, #tpu.memory_space<vmem>>, vector<16x128xf32>
    %c0_2 = arith.constant 0 : index
    %c0_3 = arith.constant 0 : index
    %c0_4 = arith.constant 0 : index
    %4 = vector.load %arg3[%c0_2, %c0_3, %c0_4] : memref<1x128x128xf32, #tpu.memory_space<vmem>>, vector<1x128x128xf32>
    %5 = vector.shape_cast %4 : vector<1x128x128xf32> to vector<128x128xf32>
    %cst = arith.constant dense<0.000000e+00> : vector<16x128xf32>
    %6 = tpu.matmul %3, %5, %cst {dimension_numbers = #tpu.dot_dimension_numbers<[1], [0], [0], [1], [0, 0, 1, 1], [], []>} : vector<16x128xf32>, vector<128x128xf32>, vector<16x128xf32> -> vector<16x128xf32>
    %c0_5 = arith.constant 0 : index
    %c0_6 = arith.constant 0 : index
    %7 = vector.load %arg6[%c0_5, %c0_6] : memref<16x16xf32, #tpu.memory_space<vmem>>, vector<16x16xf32>
    %cst_7 = arith.constant dense<0.000000e+00> : vector<16x128xf32>
    %8 = tpu.matmul %7, %6, %cst_7 {dimension_numbers = #tpu.dot_dimension_numbers<[1], [0], [0], [1], [0, 0, 1, 1], [], []>} : vector<16x16xf32>, vector<16x128xf32>, vector<16x128xf32> -> vector<16x128xf32>
    %c0_8 = arith.constant 0 : index
    %c0_9 = arith.constant 0 : index
    %c0_10 = arith.constant 0 : index
    %9 = vector.load %arg4[%c0_8, %c0_9, %c0_10] : memref<1x1x128xf32, #tpu.memory_space<vmem>>, vector<1x1x128xf32>
    %10 = vector.shape_cast %9 : vector<1x1x128xf32> to vector<1x128xf32>
    %11 = vector.broadcast %10 : vector<1x128xf32> to vector<16x128xf32>
    %12 = arith.addf %8, %11 : vector<16x128xf32>
    %cst_11 = arith.constant 0.000000e+00 : f32
    %13 = vector.broadcast %cst_11 : f32 to vector<16x128xf32>
    %14 = arith.maximumf %12, %13 : vector<16x128xf32>
    %c0_12 = arith.constant 0 : index
    %c0_13 = arith.constant 0 : index
    %15 = vector.load %arg5[%c0_12, %c0_13] : memref<16x128xf32, #tpu.memory_space<vmem>>, vector<16x128xf32>
    tpu.vector_store %arg5[%c0_12, %c0_13], %14 {strides = array<i32>} : memref<16x128xf32, #tpu.memory_space<vmem>>, vector<16x128xf32>,
    return
  }
  func.func @transform_2(%arg0: i32) -> (i32, i32, i32) {
    %c0_i32 = arith.constant 0 : i32
    %c0_i32_0 = arith.constant 0 : i32
    %c0_i32_1 = arith.constant 0 : i32
    return %arg0, %c0_i32, %c0_i32_0 : i32, i32, i32
  }
  func.func @transform_3(%arg0: i32) -> (i32, i32, i32) {
    %c0_i32 = arith.constant 0 : i32
    %c0_i32_0 = arith.constant 0 : i32
    %c0_i32_1 = arith.constant 0 : i32
    return %arg0, %c0_i32, %c0_i32_0 : i32, i32, i32
  }
  func.func @transform_4(%arg0: i32) -> (i32, i32) {
    %c0_i32 = arith.constant 0 : i32
    %c0_i32_0 = arith.constant 0 : i32
    %c0_i32_1 = arith.constant 0 : i32
    return %c0_i32, %c0_i32_0 : i32, i32
  }
}

</mosaic_0001>

<llo_original>
// kernel: tpu_custom_call.1
$region0: #{tpu_custom_call.1}
  #allocation0 [shape = 'u32[]', space=smem, size = 0x4, offset = 0x4, fixed_abs, tag = 'smem constant byte address 0x4 - core index']
  #allocation1 [shape = 'u32[144,128]{1,0:T(1,128)}', space=vmem, size = 0x12000, scoped, tag = 'internal scratch']
  #allocation2 [shape = 'f32[16,16]{1,0:T(8,128)}', space=vmem, size = 0x2000, scoped, tag = 'scratch operand']
  #allocation3 [shape = 's32[2]{0}', space=sflag, size = 0x8, scoped, tag = 'scratch operand']
  #allocation8 [shape = 's32[]', space=sflag, size = 0x4, offset = 0, fixed_abs, tag = 'sflag constant byte address 0x0 - dummy sync flag']
  #allocation9 [shape = 's32[]', space=sflag, size = 0x4, offset = 0, fixed_abs, tag = 'sflag constant byte address 0x0 - dummy sync flag']
  #allocation10 [shape = 'u32[]', space=smem, size = 0x4, offset = 0x44, fixed_abs, tag = 'smem constant byte address 0x44 - assertion arg 0']
  #allocation11 [shape = 'u32[]', space=smem, size = 0x4, offset = 0x48, fixed_abs, tag = 'smem constant byte address 0x48 - assertion arg 1']
  #allocation12 [shape = 's32[]', space=sflag, size = 0x4, offset = 0, fixed_abs, tag = 'sflag constant byte address 0x0 - dummy sync flag']
  #allocation13 [shape = 's32[]', space=sflag, size = 0x4, offset = 0, fixed_abs, tag = 'sflag constant byte address 0x0 - dummy sync flag']
  %s0 = inlined_call_operand.hbm [shape: f32[16,16], index: 0, kind: input, shape index: {}]
  %s1 = inlined_call_operand.hbm [shape: f32[16,128], index: 1, kind: input, shape index: {}]
  %s2 = inlined_call_operand.hbm [shape: f32[3,128,128], index: 2, kind: input, shape index: {}]
  %s3 = inlined_call_operand.vmem [shape: f32[3,1,128], index: 3, kind: input, shape index: {}]
  %s4 = inlined_call_operand.hbm [shape: f32[16,128], index: 4, kind: output, shape index: {}]
  %s5 = sld [smem:[#allocation0]]
  $region57: #{tpu_custom_call.1} parent=0
    _
  %s7 = ssub.s32 1, %s5
  %s8 = scalar_select 0, %s7, %s5
  $region1: #{tpu_custom_call.1} parent=0
    #allocation4 [shape = 'u8[131072]{0}', space=vmem, size = 0x20000, scoped, tag = 'input window, operand 2']
    #allocation5 [shape = 's32[2]{0}', space=sflag, size = 0x8, scoped, tag = 'scoped memory for tpu_custom_call.1']
    #allocation6 [shape = 's32[2]{0}', space=sflag, size = 0x8, scoped, tag = 'scoped memory for tpu_custom_call.1']
    #allocation7 [shape = 'u8[8192]{0}', space=vmem, size = 0x2000, scoped, tag = 'output window, operand 0, single buffered']
    %9 = vsyncpa [#allocation5], 0
    %s10 = scalar_lea.sflag [#allocation5], 1
    %11 = vsyncpa %s10, 0
    %12 = vsyncpa [#allocation6], 0
    loop: start=0, step=1, limit=5
    $region2: #{tpu_custom_call.1} parent=1 // loop_pre_header
      _
    $region3: #{tpu_custom_call.1} parent=1 // loop_header
      %s14 = sphi 0, %s18
      %p15 = scmp.ge.s32.totalorder %s14, 5
      %s24 = sphi 0, %s26
      %s27 = sphi 0, %s24
      %s28 = sphi 0, %s27
      %s44 = sphi 0, %s28
      %s50 = sphi 0, %s52
      %s53 = sphi 0, %s50
      %s54 = sphi 0, %s53
      %s70 = sphi 0, %s54
      %s74 = sphi 0, %s74
      %s76 = sphi 0, %s74
      %s77 = sphi 0, %s76
      %s91 = sphi 0, %s77
    $region4: #{tpu_custom_call.1} parent=1 // loop_header_branch
      %17 = sbr.rel (%p15) target = $region8
    $region5: #{tpu_custom_call.1} parent=1 // loop_body
      %s19 = ssub.s32 %s14, 1
      %s20 = ssub.s32 %s14, 2
      %s21 = sadd.s32 %s14, 1
      %s22 = ssub.s32 %s14, %s21
      %p23 = scmp.eq.s32.totalorder %s22, 0
      %s25 = sadd.s32 %s24, 1
      %s26 = scalar_select %p23, %s24, %s25
      %p29 = pneg %p23
      %p30 = scmp.eq.s32.totalorder %s14, 2
      %p31 = por %p29, %p30
      %p32 = scmp.ne.s32.totalorder %s24, %s27
      %p33 = scmp.eq.s32.totalorder %s14, 0
      %p34 = por %p32, %p33
      %p35 = scmp.ne.s32.totalorder %s24, %s27
      %p36 = scmp.eq.s32.totalorder %s19, 2
      %p37 = por %p35, %p36
      %p38 = scmp.ne.s32.totalorder %s27, %s28
      %p39 = scmp.eq.s32.totalorder %s19, 0
      %p40 = por %p38, %p39
      %p41 = scmp.ne.s32.totalorder %s27, %s28
      %p42 = scmp.eq.s32.totalorder %s20, 2
      %p43 = por %p41, %p42
      %p45 = scmp.ne.s32.totalorder %s28, %s44
      %p46 = scmp.eq.s32.totalorder %s20, 0
      %p47 = por %p45, %p46
      %s48 = ssub.s32 %s14, %s21
      %p49 = scmp.eq.s32.totalorder %s48, 0
      %s51 = sadd.s32 %s50, 1
      %s52 = scalar_select %p49, %s50, %s51
      %p55 = pneg %p49
      %p56 = scmp.eq.s32.totalorder %s14, 2
      %p57 = por %p55, %p56
      %p58 = scmp.ne.s32.totalorder %s50, %s53
      %p59 = scmp.eq.s32.totalorder %s14, 0
      %p60 = por %p58, %p59
      %p61 = scmp.ne.s32.totalorder %s50, %s53
      %p62 = scmp.eq.s32.totalorder %s19, 2
      %p63 = por %p61, %p62
      %p64 = scmp.ne.s32.totalorder %s53, %s54
      %p65 = scmp.eq.s32.totalorder %s19, 0
      %p66 = por %p64, %p65
      %p67 = scmp.ne.s32.totalorder %s53, %s54
      %p68 = scmp.eq.s32.totalorder %s20, 2
      %p69 = por %p67, %p68
      %p71 = scmp.ne.s32.totalorder %s54, %s70
      %p72 = scmp.eq.s32.totalorder %s20, 0
      %p73 = por %p71, %p72
      %s75 = sadd.s32 %s74, 1
      %p78 = scmp.eq.s32.totalorder %s14, 2
      %p79 = scmp.ne.s32.totalorder %s74, %s76
      %p80 = scmp.eq.s32.totalorder %s14, 0
      %p81 = por %p79, %p80
      %p82 = scmp.ne.s32.totalorder %s74, %s76
      %p83 = scmp.eq.s32.totalorder %s19, 2
      %p84 = por %p82, %p83
      %p85 = scmp.ne.s32.totalorder %s76, %s77
      %p86 = scmp.eq.s32.totalorder %s19, 0
      %p87 = por %p85, %p86
      %p88 = scmp.ne.s32.totalorder %s76, %s77
      %p89 = scmp.eq.s32.totalorder %s20, 2
      %p90 = por %p88, %p89
      %p92 = scmp.ne.s32.totalorder %s77, %s91
      %p93 = scmp.eq.s32.totalorder %s20, 0
      %p94 = por %p92, %p93
      %p95 = scmp.le.s32.totalorder 1, %s14
      %p96 = scmp.lt.s32.totalorder %s14, 4
      %p97 = pnand %p95, %p96
      %p98 = pneg %p97
      // Predicated region
      $region9: #{tpu_custom_call.1} parent=5 // pred_check
        _
      $region10: #{tpu_custom_call.1} parent=5 // pred_check_branch
        %100 = sbr.rel (%p97) target = $region12
      $region11: #{tpu_custom_call.1} parent=5 // pred_region
        %s101 = ssub.s32 %s14, 1
      $region12: #{tpu_custom_call.1} parent=5 // pred_fallthru
        _
      %p102 = scmp.lt.s32.totalorder %s14, 3
      // Predicated region
      $region13: #{tpu_custom_call.1} parent=5 // pred_check
        %p103 = pneg %p102
      $region14: #{tpu_custom_call.1} parent=5 // pred_check_branch
        %105 = sbr.rel (%p103) target = $region16
      $region15: #{tpu_custom_call.1} parent=5 // pred_region
        // Predicated region
        $region17: #{tpu_custom_call.1} parent=15 // pred_check
          %p106 = pneg %p34
        $region18: #{tpu_custom_call.1} parent=15 // pred_check_branch
          %108 = sbr.rel (%p106) target = $region20
        $region19: #{tpu_custom_call.1} parent=15 // pred_region
          %s109 = sand.u32 %s24, 1
          %s110 = scalar_lea.sflag [#allocation5], %s109
          %s111 = sand.u32 %s24, 1
          %s112 = smul.addr %s111, 128
          %s113 = scalar_lea.vmem [#allocation4], %s112
          %s115 = ssub.s32 2048, 2048
          %116 = vsyncadd %s110, %s115
          %s117 = smul.addr %s14, 16
          %s118 = smul.addr %s117, 128
          %s119 = scalar_lea.hbm %s2, %s118
          %s120 = sshll.u32 %s113, 4
          %s121 = int_to_ptr.vmem [resolvable:$true] %s120
          %126 = dma.hbm_to_vmem [thread:$0]  %s119, 2048, %s121, %s110, 128, 128, 8
        $region20: #{tpu_custom_call.1} parent=15 // pred_fallthru
          _
        // Predicated region
        $region21: #{tpu_custom_call.1} parent=15 // pred_check
          %p127 = pneg %p60
        $region22: #{tpu_custom_call.1} parent=15 // pred_check_branch
          %129 = sbr.rel (%p127) target = $region24
        $region23: #{tpu_custom_call.1} parent=15 // pred_region
          %p130 = scmp.lt.s32.totalorder %s14, 2
          %s131 = scalar_select %p130, %s14, 2
          %s132 = scalar_lea.vmem %s3, %s131
        $region24: #{tpu_custom_call.1} parent=15 // pred_fallthru
          _
      $region16: #{tpu_custom_call.1} parent=5 // pred_fallthru
        _
      %p133 = scmp.le.s32.totalorder 1, %s14
      %p134 = scmp.lt.s32.totalorder %s14, 4
      %p135 = pnand %p133, %p134
      %p136 = pneg %p135
      // Predicated region
      $region25: #{tpu_custom_call.1} parent=5 // pred_check
        _
      $region26: #{tpu_custom_call.1} parent=5 // pred_check_branch
        %138 = sbr.rel (%p135) target = $region28
      $region27: #{tpu_custom_call.1} parent=5 // pred_region
        %s139 = ssub.s32 %s14, 1
        %s140 = sand.u32 %s27, 1
        %s141 = scalar_lea.sflag [#allocation5], %s140
        %s142 = sand.u32 %s27, 1
        %s143 = smul.addr %s142, 128
        %s144 = scalar_lea.vmem [#allocation4], %s143
        // Predicated region
        $region29: #{tpu_custom_call.1} parent=27 // pred_check
          %p145 = pneg %p40
        $region30: #{tpu_custom_call.1} parent=27 // pred_check_branch
          %147 = sbr.rel (%p145) target = $region32
        $region31: #{tpu_custom_call.1} parent=27 // pred_region
          %148 = dma.done %s141, 2048
        $region32: #{tpu_custom_call.1} parent=27 // pred_fallthru
          _
        %s149 = sand.u32 %s27, 1
        %s150 = scalar_lea.sflag [#allocation5], %s149
        %s151 = sand.u32 %s27, 1
        %s152 = smul.addr %s151, 128
        %s153 = scalar_lea.vmem [#allocation4], %s152
        %p154 = pneg %p40
        %p155 = pneg %p37
        %p156 = scmp.lt.s32.totalorder %s19, 2
        %s157 = scalar_select %p156, %s19, 2
        %s158 = scalar_lea.vmem %s3, %s157
        %p159 = pneg %p66
        %p160 = pneg %p63
        %p161 = pneg %p87
        %p162 = pneg %p84
        %p163 = scmp.lt.s32.totalorder %s19, 2
        %s164 = scalar_select %p163, %s19, 2
        %s165 = scalar_lea.vmem %s3, %s164
        %p166 = scmp.eq.s32.totalorder %s19, 0
        // Predicated region
        $region33: #{tpu_custom_call.1} parent=27 // pred_check
          %p167 = pneg %p166
        $region34: #{tpu_custom_call.1} parent=27 // pred_check_branch
          %169 = sbr.rel (%p167) target = $region36
        $region35: #{tpu_custom_call.1} parent=27 // pred_region
          // Predicated region
          $region37: #{tpu_custom_call.1} parent=35 // pred_check
            _
          $region38: #{tpu_custom_call.1} parent=35 // pred_check_branch
            %171 = sbr.rel target = $region40
          $region39: #{tpu_custom_call.1} parent=35 // pred_region
            %172 = sst [smem:[#allocation10]] [#allocation9]
            %173 = sst [smem:[#allocation11]] [#allocation8]
          $region40: #{tpu_custom_call.1} parent=35 // pred_fallthru
            _
          %175 = shalt.err (0)
          %s177 = sshll.u32 [#allocation2], 4
          %s178 = int_to_ptr.vmem [resolvable:$true] %s177
          %180 = dma.hbm_to_vmem [thread:$0]  %s0, 256, %s178, [#allocation3]
          %s181 = scalar_lea.sflag [#allocation3], 1
          // Predicated region
          $region41: #{tpu_custom_call.1} parent=35 // pred_check
            _
          $region42: #{tpu_custom_call.1} parent=35 // pred_check_branch
            %183 = sbr.rel target = $region44
          $region43: #{tpu_custom_call.1} parent=35 // pred_region
            %184 = sst [smem:[#allocation10]] [#allocation13]
            %185 = sst [smem:[#allocation11]] [#allocation12]
          $region44: #{tpu_custom_call.1} parent=35 // pred_fallthru
            _
          %187 = shalt.err (0)
          %s189 = sshll.u32 [#allocation7], 4
          %s190 = int_to_ptr.vmem [resolvable:$true] %s189
          %192 = dma.hbm_to_vmem [thread:$0]  %s1, 256, %s190, %s181
          %s193 = smul.u32 16, 1
          %s194 = sshll.u32 %s193, 4
          %195 = dma.done [#allocation3], %s194
          %s196 = sshll.u32 %s193, 4
          %197 = dma.done %s181, %s196
          %v198 = vld [vmem:[#allocation2] sm:$0xff]
          %v199 = vld [vmem:[#allocation2 + $0x8] sm:$0xff]
          %v200 = vlaneseq
          %v201 = vshrl.u32 %v200, 7
          %v202 = vadd.s32 %v201, 8
          %v203 = vlaneseq
          %v204 = vand.u32 %v203, 127
          %vm205 = vcmp.eq.s32.totalorder %v201, %v204
          %vm206 = vcmp.eq.s32.totalorder %v202, %v204
          %v207 = vsel %vm205, 1.0, %v198
          %v208 = vsel %vm206, 1.0, %v199
          %vm209 = vcmask 130048
          %v210 = vsel %vm209, %v207, 0.0
          %211 = vadd.xlane.f32.xlu0 %v210
          %v212 = vpop.xlane.xlu0 %211
          %v213 = vsel %vm209, %v208, 0.0
          %214 = vadd.xlane.f32.xlu0 %v213
          %v215 = vpop.xlane.xlu0 %214
          %v216 = vrsqrt.pop %v212
          %v217 = vrsqrt.pop %v215
          %v218 = vmul.f32 %v207, %v216
          %v219 = vmul.f32 %v208, %v217
          %220 = vxpose.xlu0.b32.start [1/16] %v216, 128
          %221 = vxpose.xlu0.b32.cont [2/16] %v217, 128
          %222 = vxpose.xlu0.b32.cont [3/16] 0.0, 128
          %223 = vxpose.xlu0.b32.cont [4/16] 0.0, 128
          %224 = vxpose.xlu0.b32.cont [5/16] 0.0, 128
          %225 = vxpose.xlu0.b32.cont [6/16] 0.0, 128
          %226 = vxpose.xlu0.b32.cont [7/16] 0.0, 128
          %227 = vxpose.xlu0.b32.cont [8/16] 0.0, 128
          %228 = vxpose.xlu0.b32.cont [9/16] 0.0, 128
          %229 = vxpose.xlu0.b32.cont [10/16] 0.0, 128
          %230 = vxpose.xlu0.b32.cont [11/16] 0.0, 128
          %231 = vxpose.xlu0.b32.cont [12/16] 0.0, 128
          %232 = vxpose.xlu0.b32.cont [13/16] 0.0, 128
          %233 = vxpose.xlu0.b32.cont [14/16] 0.0, 128
          %234 = vxpose.xlu0.b32.cont [15/16] 0.0, 128
          %235 = vxpose.xlu0.b32.end [16/16] 0.0, 128
          %v236 = vpop.trf.xlu0
          %v237 = vpop.trf.xlu0
          %v238 = vpop.trf.xlu0
          %v239 = vpop.trf.xlu0
          %v240 = vpop.trf.xlu0
          %v241 = vpop.trf.xlu0
          %v242 = vpop.trf.xlu0
          %v243 = vpop.trf.xlu0
          %v244 = vpop.trf.xlu0
          %v245 = vpop.trf.xlu0
          %v246 = vpop.trf.xlu0
          %v247 = vpop.trf.xlu0
          %v248 = vpop.trf.xlu0
          %v249 = vpop.trf.xlu0
          %v250 = vpop.trf.xlu0
          %v251 = vpop.trf.xlu0
          %v252 = vlaneseq
          %v253 = vshrl.u32 %v252, 7
          %v254 = vsub.s32 0, %v253
          %v255 = vrot.slane %v236, %v254
          %v256 = vmul.f32 %v218, %v255
          %v257 = vmul.f32 %v219, %v255
          %v258 = vsel %vm209, %v256, 0.0
          %v259 = vsel %vm209, %v257, 0.0
          %v260 = vadd.f32 %v258, %v259
          %v261 = vrot.slane %v260, 4
          %v262 = vadd.f32 %v260, %v261
          %v263 = vrot.slane %v262, 2
          %v264 = vadd.f32 %v262, %v263
          %v265 = vrot.slane %v264, 1
          %v266 = vadd.f32 %v264, %v265
          %v267 = vrsqrt.pop %v266
          %268 = vxpose.xlu0.b32.start [1/16] %v267, 128
          %269 = vxpose.xlu0.b32.cont [2/16] 0.0, 128
          %270 = vxpose.xlu0.b32.cont [3/16] 0.0, 128
          %271 = vxpose.xlu0.b32.cont [4/16] 0.0, 128
          %272 = vxpose.xlu0.b32.cont [5/16] 0.0, 128
          %273 = vxpose.xlu0.b32.cont [6/16] 0.0, 128
          %274 = vxpose.xlu0.b32.cont [7/16] 0.0, 128
          %275 = vxpose.xlu0.b32.cont [8/16] 0.0, 128
          %276 = vxpose.xlu0.b32.cont [9/16] 0.0, 128
          %277 = vxpose.xlu0.b32.cont [10/16] 0.0, 128
          %278 = vxpose.xlu0.b32.cont [11/16] 0.0, 128
          %279 = vxpose.xlu0.b32.cont [12/16] 0.0, 128
          %280 = vxpose.xlu0.b32.cont [13/16] 0.0, 128
          %281 = vxpose.xlu0.b32.cont [14/16] 0.0, 128
          %282 = vxpose.xlu0.b32.cont [15/16] 0.0, 128
          %283 = vxpose.xlu0.b32.end [16/16] 0.0, 128
          %v284 = vpop.trf.xlu0
          %v285 = vpop.trf.xlu0
          %v286 = vpop.trf.xlu0
          %v287 = vpop.trf.xlu0
          %v288 = vpop.trf.xlu0
          %v289 = vpop.trf.xlu0
          %v290 = vpop.trf.xlu0
          %v291 = vpop.trf.xlu0
          %v292 = vpop.trf.xlu0
          %v293 = vpop.trf.xlu0
          %v294 = vpop.trf.xlu0
          %v295 = vpop.trf.xlu0
          %v296 = vpop.trf.xlu0
          %v297 = vpop.trf.xlu0
          %v298 = vpop.trf.xlu0
          %v299 = vpop.trf.xlu0
          %301 = vset.pattern.permute.xlu0 0
          %302 = vperm.xlu0 %301, %v284
          %v303 = vpop.permute.xlu0 %302
          %306 = vset.pattern.permute.xlu0 0
          %307 = vperm.xlu0 %306, %v285
          %v308 = vpop.permute.xlu0 %307
          %v310 = vmul.f32 %v256, %v303
          %v311 = vmul.f32 %v257, %v308
          %v312 = vmul.f32 %v310, %v267
          %v313 = vmul.f32 %v311, %v267
          %314 = vst.msk [vmem:[#allocation2] sm:$0xff] %vm209, %v312
          %315 = vst.msk [vmem:[#allocation2 + $0x8] sm:$0xff] %vm209, %v313
        $region36: #{tpu_custom_call.1} parent=27 // pred_fallthru
          _
        %v316 = vld [vmem:[#allocation7] sm:$0xff]
        %v317 = vld [vmem:[#allocation7 + $0x8] sm:$0xff]
        %v318 = vld [vmem:[%s144] sm:$0xff]
        %v319 = vld [vmem:[%s144 + $0x8] sm:$0xff]
        %v320 = vld [vmem:[%s144 + $0x10] sm:$0xff]
        %v321 = vld [vmem:[%s144 + $0x18] sm:$0xff]
        %v322 = vld [vmem:[%s144 + $0x20] sm:$0xff]
        %v323 = vld [vmem:[%s144 + $0x28] sm:$0xff]
        %v324 = vld [vmem:[%s144 + $0x30] sm:$0xff]
        %v325 = vld [vmem:[%s144 + $0x38] sm:$0xff]
        %v326 = vld [vmem:[%s144 + $0x40] sm:$0xff]
        %v327 = vld [vmem:[%s144 + $0x48] sm:$0xff]
        %v328 = vld [vmem:[%s144 + $0x50] sm:$0xff]
        %v329 = vld [vmem:[%s144 + $0x58] sm:$0xff]
        %v330 = vld [vmem:[%s144 + $0x60] sm:$0xff]
        %v331 = vld [vmem:[%s144 + $0x68] sm:$0xff]
        %v332 = vld [vmem:[%s144 + $0x70] sm:$0xff]
        %v333 = vld [vmem:[%s144 + $0x78] sm:$0xff]
        %334 = vmatprep.subr.mxu0 0.0
        %335 = vmatpush1.msra.mxu0 %v318
        %336 = vmatprep.subr.mxu0 0.0
        %337 = vmatpush1.msra.mxu0 %v319
        %338 = vmatprep.subr.mxu0 0.0
        %339 = vmatpush1.msra.mxu0 %v320
        %340 = vmatprep.subr.mxu0 0.0
        %341 = vmatpush1.msra.mxu0 %v321
        %342 = vmatprep.subr.mxu0 0.0
        %343 = vmatpush1.msra.mxu0 %v322
        %344 = vmatprep.subr.mxu0 0.0
        %345 = vmatpush1.msra.mxu0 %v323
        %346 = vmatprep.subr.mxu0 0.0
        %347 = vmatpush1.msra.mxu0 %v324
        %348 = vmatprep.subr.mxu0 0.0
        %349 = vmatpush1.msra.mxu0 %v325
        %350 = vmatprep.subr.mxu0 0.0
        %351 = vmatpush1.msra.mxu0 %v326
        %352 = vmatprep.subr.mxu0 0.0
        %353 = vmatpush1.msra.mxu0 %v327
        %354 = vmatprep.subr.mxu0 0.0
        %355 = vmatpush1.msra.mxu0 %v328
        %356 = vmatprep.subr.mxu0 0.0
        %357 = vmatpush1.msra.mxu0 %v329
        %358 = vmatprep.subr.mxu0 0.0
        %359 = vmatpush1.msra.mxu0 %v330
        %360 = vmatprep.subr.mxu0 0.0
        %361 = vmatpush1.msra.mxu0 %v331
        %362 = vmatprep.subr.mxu0 0.0
        %363 = vmatpush1.msra.mxu0 %v332
        %364 = vmatprep.subr.mxu0 0.0
        %365 = vmatpush1.msra.mxu0 %v333
        %366 = vmatprep.subr.mxu0 0.0
        %367 = vmatpush1.msra.mxu0 0.0
        %368 = vmatprep.subr.mxu0 0.0
        %369 = vmatpush1.msra.mxu0 0.0
        %370 = vmatprep.subr.mxu0 0.0
        %371 = vmatpush1.msra.mxu0 0.0
        %372 = vmatprep.subr.mxu0 0.0
        %373 = vmatpush1.msra.mxu0 0.0
        %374 = vmatprep.subr.mxu0 0.0
        %375 = vmatpush1.msra.mxu0 0.0
        %376 = vmatprep.subr.mxu0 0.0
        %377 = vmatpush1.msra.mxu0 0.0
        %378 = vmatprep.subr.mxu0 0.0
        %379 = vmatpush1.msra.mxu0 0.0
        %380 = vmatprep.subr.mxu0 0.0
        %381 = vmatpush1.msra.mxu0 0.0
        %382 = vmatprep.subr.mxu0 0.0
        %383 = vmatpush1.msra.mxu0 0.0
        %384 = vmatprep.subr.mxu0 0.0
        %385 = vmatpush1.msra.mxu0 0.0
        %386 = vmatprep.subr.mxu0 0.0
        %387 = vmatpush1.msra.mxu0 0.0
        %388 = vmatprep.subr.mxu0 0.0
        %389 = vmatpush1.msra.mxu0 0.0
        %390 = vmatprep.subr.mxu0 0.0
        %391 = vmatpush1.msra.mxu0 0.0
        %392 = vmatprep.subr.mxu0 0.0
        %393 = vmatpush1.msra.mxu0 0.0
        %394 = vmatprep.subr.mxu0 0.0
        %395 = vmatpush1.msra.mxu0 0.0
        %396 = vmatprep.subr.mxu0 0.0
        %397 = vmatpush1.msra.mxu0 0.0
        %398 = vmatprep.mubr.f32.mxu0 0.0
        %399 = vmatmul.mubr.f32.gmra.mrb[0].mxu0 %v316
        %v400 = vpop.f32.mrb[0].mxu0
        %v401 = vadd.f32 0.0, %v400
        %v402 = vpop.f32.mrb[0].mxu0
        %403 = vmatprep.mubr.f32.mxu0 0.0
        %404 = vmatmul.mubr.f32.gmra.mrb[0].mxu0 %v317
        %v405 = vpop.f32.mrb[0].mxu0
        %v406 = vadd.f32 0.0, %v405
        %v407 = vpop.f32.mrb[0].mxu0
        %408 = vdwg.mxu0
        %v409 = vld [vmem:[#allocation2] sm:$0xff]
        %v410 = vld [vmem:[#allocation2 + $0x8] sm:$0xff]
        %v411 = vld [vmem:[%s165] sm:$0x1]
        %v413 = vlaneseq
        %v414 = vshrl.u32 %v413, 7
        %v415 = vsub.s32 0, %v414
        %v416 = vrot.slane %v411, %v415
        %vm418 = vcmask 130048
        %v420 = vsel %vm418, %v409, 0
        %v423 = vsel %vm418, %v410, 0
        %425 = vmatprep.subr.mxu0 0.0
        %426 = vmatpush1.msra.mxu0 %v401
        %427 = vmatprep.subr.mxu0 0.0
        %428 = vmatpush1.msra.mxu0 %v406
        %429 = vmatprep.subr.mxu0 0.0
        %430 = vmatpush1.msra.mxu0 0.0
        %431 = vmatprep.subr.mxu0 0.0
        %432 = vmatpush1.msra.mxu0 0.0
        %433 = vmatprep.subr.mxu0 0.0
        %434 = vmatpush1.msra.mxu0 0.0
        %435 = vmatprep.subr.mxu0 0.0
        %436 = vmatpush1.msra.mxu0 0.0
        %437 = vmatprep.subr.mxu0 0.0
        %438 = vmatpush1.msra.mxu0 0.0
        %439 = vmatprep.subr.mxu0 0.0
        %440 = vmatpush1.msra.mxu0 0.0
        %441 = vmatprep.subr.mxu0 0.0
        %442 = vmatpush1.msra.mxu0 0.0
        %443 = vmatprep.subr.mxu0 0.0
        %444 = vmatpush1.msra.mxu0 0.0
        %445 = vmatprep.subr.mxu0 0.0
        %446 = vmatpush1.msra.mxu0 0.0
        %447 = vmatprep.subr.mxu0 0.0
        %448 = vmatpush1.msra.mxu0 0.0
        %449 = vmatprep.subr.mxu0 0.0
        %450 = vmatpush1.msra.mxu0 0.0
        %451 = vmatprep.subr.mxu0 0.0
        %452 = vmatpush1.msra.mxu0 0.0
        %453 = vmatprep.subr.mxu0 0.0
        %454 = vmatpush1.msra.mxu0 0.0
        %455 = vmatprep.subr.mxu0 0.0
        %456 = vmatpush1.msra.mxu0 0.0
        %457 = vmatprep.subr.mxu0 0.0
        %458 = vmatpush1.msra.mxu0 0.0
        %459 = vmatprep.subr.mxu0 0.0
        %460 = vmatpush1.msra.mxu0 0.0
        %461 = vmatprep.subr.mxu0 0.0
        %462 = vmatpush1.msra.mxu0 0.0
        %463 = vmatprep.subr.mxu0 0.0
        %464 = vmatpush1.msra.mxu0 0.0
        %465 = vmatprep.subr.mxu0 0.0
        %466 = vmatpush1.msra.mxu0 0.0
        %467 = vmatprep.subr.mxu0 0.0
        %468 = vmatpush1.msra.mxu0 0.0
        %469 = vmatprep.subr.mxu0 0.0
        %470 = vmatpush1.msra.mxu0 0.0
        %471 = vmatprep.subr.mxu0 0.0
        %472 = vmatpush1.msra.mxu0 0.0
        %473 = vmatprep.subr.mxu0 0.0
        %474 = vmatpush1.msra.mxu0 0.0
        %475 = vmatprep.subr.mxu0 0.0
        %476 = vmatpush1.msra.mxu0 0.0
        %477 = vmatprep.subr.mxu0 0.0
        %478 = vmatpush1.msra.mxu0 0.0
        %479 = vmatprep.subr.mxu0 0.0
        %480 = vmatpush1.msra.mxu0 0.0
        %481 = vmatprep.subr.mxu0 0.0
        %482 = vmatpush1.msra.mxu0 0.0
        %483 = vmatprep.subr.mxu0 0.0
        %484 = vmatpush1.msra.mxu0 0.0
        %485 = vmatprep.subr.mxu0 0.0
        %486 = vmatpush1.msra.mxu0 0.0
        %487 = vmatprep.subr.mxu0 0.0
        %488 = vmatpush1.msra.mxu0 0.0
        %489 = vmatprep.mubr.f32.mxu0 0.0
        %490 = vmatmul.mubr.f32.gmra.mrb[0].mxu0 %v420
        %v491 = vpop.f32.mrb[0].mxu0
        %v492 = vadd.f32 %v416, %v491
        %v493 = vpop.f32.mrb[0].mxu0
        %494 = vmatprep.mubr.f32.mxu0 0.0
        %495 = vmatmul.mubr.f32.gmra.mrb[0].mxu0 %v423
        %v496 = vpop.f32.mrb[0].mxu0
        %v497 = vadd.f32 %v416, %v496
        %v498 = vpop.f32.mrb[0].mxu0
        %499 = vdwg.mxu0
        %v500 = vmax.f32 %v492, 0.0
        %v501 = vmax.f32 %v497, 0.0
        %502 = vst [vmem:[#allocation7] sm:$0xff] %v500
        %503 = vst [vmem:[#allocation7 + $0x8] sm:$0xff] %v501
        // Predicated region
        $region45: #{tpu_custom_call.1} parent=27 // pred_check
          %p504 = pneg %p84
        $region46: #{tpu_custom_call.1} parent=27 // pred_check_branch
          %506 = sbr.rel (%p504) target = $region48
        $region47: #{tpu_custom_call.1} parent=27 // pred_region
          %s508 = ssub.s32 256, 256
          %509 = vsyncadd [#allocation6], %s508
          %s510 = sshll.u32 [#allocation7], 4
          %s511 = int_to_ptr.vmem [resolvable:$true] %s510
          %516 = dma.vmem_to_hbm [thread:$0]  %s511, 256, %s4, [#allocation6], 128, 128, 8
        $region48: #{tpu_custom_call.1} parent=27 // pred_fallthru
          _
        // Predicated region
        $region49: #{tpu_custom_call.1} parent=27 // pred_check
          %p517 = pneg %p84
        $region50: #{tpu_custom_call.1} parent=27 // pred_check_branch
          %519 = sbr.rel (%p517) target = $region52
        $region51: #{tpu_custom_call.1} parent=27 // pred_region
          %520 = dma.done [#allocation6], 256
        $region52: #{tpu_custom_call.1} parent=27 // pred_fallthru
          _
      $region28: #{tpu_custom_call.1} parent=5 // pred_fallthru
        _
      %p521 = scmp.le.s32.totalorder 2, %s14
      // Predicated region
      $region53: #{tpu_custom_call.1} parent=5 // pred_check
        %p522 = pneg %p521
      $region54: #{tpu_custom_call.1} parent=5 // pred_check_branch
        %524 = sbr.rel (%p522) target = $region56
      $region55: #{tpu_custom_call.1} parent=5 // pred_region
        %s525 = ssub.s32 %s14, 2
      $region56: #{tpu_custom_call.1} parent=5 // pred_fallthru
        _
    $region6: #{tpu_custom_call.1} parent=1 // loop_footer
      %s18 = sadd.s32 1, %s14
    $region7: #{tpu_custom_call.1} parent=1 // loop_footer_branch
      %13 = sbr.rel target = $region3
    $region8: #{tpu_custom_call.1} parent=1 // loop_exit
      _
    %526 = vsyncpa [#allocation5], 1
    %s527 = scalar_lea.sflag [#allocation5], 1
    %528 = vsyncpa %s527, 1
    %529 = vsyncpa [#allocation6], 1
    %s530 = scalar_lea.sflag [#allocation6], 1
    %531 = vsyncpa %s530, 1
  %532 = vsyncmov [#allocation3]
  %s533 = vpop.sfrf %532
  %p534 = scmp.eq.s32.totalorder %s533, 0
  %p535 = pneg %p534
  %537 = shalt.err (%p535)
  %s538 = scalar_lea.sflag [#allocation3], 1
  %539 = vsyncmov %s538
  %s540 = vpop.sfrf %539
  %p541 = scmp.eq.s32.totalorder %s540, 0
  %p542 = pneg %p541
  %544 = shalt.err (%p542)

// kernel: tpu_custom_call.1
$region0: #{tpu_custom_call.1}
  #allocation0 [shape = 'u32[]', space=smem, size = 0x4, offset = 0x4, fixed_abs, tag = 'smem constant byte address 0x4 - core index']
  #allocation1 [shape = 'u32[144,128]{1,0:T(1,128)}', space=vmem, size = 0x12000, scoped, tag = 'internal scratch']
  #allocation2 [shape = 'f32[16,16]{1,0:T(8,128)}', space=vmem, size = 0x2000, scoped, tag = 'scratch operand']
  #allocation3 [shape = 's32[2]{0}', space=sflag, size = 0x8, scoped, tag = 'scratch operand']
  #allocation8 [shape = 's32[]', space=sflag, size = 0x4, offset = 0, fixed_abs, tag = 'sflag constant byte address 0x0 - dummy sync flag']
  #allocation9 [shape = 's32[]', space=sflag, size = 0x4, offset = 0, fixed_abs, tag = 'sflag constant byte address 0x0 - dummy sync flag']
  #allocation10 [shape = 'u32[]', space=smem, size = 0x4, offset = 0x44, fixed_abs, tag = 'smem constant byte address 0x44 - assertion arg 0']
  #allocation11 [shape = 'u32[]', space=smem, size = 0x4, offset = 0x48, fixed_abs, tag = 'smem constant byte address 0x48 - assertion arg 1']
  #allocation12 [shape = 's32[]', space=sflag, size = 0x4, offset = 0, fixed_abs, tag = 'sflag constant byte address 0x0 - dummy sync flag']
  #allocation13 [shape = 's32[]', space=sflag, size = 0x4, offset = 0, fixed_abs, tag = 'sflag constant byte address 0x0 - dummy sync flag']
  %s0 = inlined_call_operand.hbm [shape: f32[16,16], index: 0, kind: input, shape index: {}]
  %s1 = inlined_call_operand.hbm [shape: f32[16,128], index: 1, kind: input, shape index: {}]
  %s2 = inlined_call_operand.hbm [shape: f32[3,128,128], index: 2, kind: input, shape index: {}]
  %s3 = inlined_call_operand.vmem [shape: f32[3,1,128], index: 3, kind: input, shape index: {}]
  %s4 = inlined_call_operand.hbm [shape: f32[16,128], index: 4, kind: output, shape index: {}]
  %s5 = sld [smem:[#allocation0]]
  $region57: #{tpu_custom_call.1} parent=0
    _
  %s7 = ssub.s32 1, %s5
  %s8 = scalar_select 0, %s7, %s5
  $region1: #{tpu_custom_call.1} parent=0
    #allocation4 [shape = 'u8[131072]{0}', space=vmem, size = 0x20000, scoped, tag = 'input window, operand 2']
    #allocation5 [shape = 's32[2]{0}', space=sflag, size = 0x8, scoped, tag = 'scoped memory for tpu_custom_call.1']
    #allocation6 [shape = 's32[2]{0}', space=sflag, size = 0x8, scoped, tag = 'scoped memory for tpu_custom_call.1']
    #allocation7 [shape = 'u8[8192]{0}', space=vmem, size = 0x2000, scoped, tag = 'output window, operand 0, single buffered']
    %9 = vsyncpa [#allocation5], 0
    %s10 = scalar_lea.sflag [#allocation5], 1
    %11 = vsyncpa %s10, 0
    %12 = vsyncpa [#allocation6], 0
    loop: start=0, step=1, limit=5
    $region2: #{tpu_custom_call.1} parent=1 // loop_pre_header
      _
    $region3: #{tpu_custom_call.1} parent=1 // loop_header
      %s14 = sphi 0, %s18
      %p15 = scmp.ge.s32.totalorder %s14, 5
      %s24 = sphi 0, %s26
      %s27 = sphi 0, %s24
      %s28 = sphi 0, %s27
      %s44 = sphi 0, %s28
      %s50 = sphi 0, %s52
      %s53 = sphi 0, %s50
      %s54 = sphi 0, %s53
      %s70 = sphi 0, %s54
      %s74 = sphi 0, %s74
      %s76 = sphi 0, %s74
      %s77 = sphi 0, %s76
      %s91 = sphi 0, %s77
    $region4: #{tpu_custom_call.1} parent=1 // loop_header_branch
      %17 = sbr.rel (%p15) target = $region8
    $region5: #{tpu_custom_call.1} parent=1 // loop_body
      %s19 = ssub.s32 %s14, 1
      %s20 = ssub.s32 %s14, 2
      %s21 = sadd.s32 %s14, 1
      %s22 = ssub.s32 %s14, %s21
      %p23 = scmp.eq.s32.totalorder %s22, 0
      %s25 = sadd.s32 %s24, 1
      %s26 = scalar_select %p23, %s24, %s25
      %p29 = pneg %p23
      %p30 = scmp.eq.s32.totalorder %s14, 2
      %p31 = por %p29, %p30
      %p32 = scmp.ne.s32.totalorder %s24, %s27
      %p33 = scmp.eq.s32.totalorder %s14, 0
      %p34 = por %p32, %p33
      %p35 = scmp.ne.s32.totalorder %s24, %s27
      %p36 = scmp.eq.s32.totalorder %s19, 2
      %p37 = por %p35, %p36
      %p38 = scmp.ne.s32.totalorder %s27, %s28
      %p39 = scmp.eq.s32.totalorder %s19, 0
      %p40 = por %p38, %p39
      %p41 = scmp.ne.s32.totalorder %s27, %s28
      %p42 = scmp.eq.s32.totalorder %s20, 2
      %p43 = por %p41, %p42
      %p45 = scmp.ne.s32.totalorder %s28, %s44
      %p46 = scmp.eq.s32.totalorder %s20, 0
      %p47 = por %p45, %p46
      %s48 = ssub.s32 %s14, %s21
      %p49 = scmp.eq.s32.totalorder %s48, 0
      %s51 = sadd.s32 %s50, 1
      %s52 = scalar_select %p49, %s50, %s51
      %p55 = pneg %p49
      %p56 = scmp.eq.s32.totalorder %s14, 2
      %p57 = por %p55, %p56
      %p58 = scmp.ne.s32.totalorder %s50, %s53
      %p59 = scmp.eq.s32.totalorder %s14, 0
      %p60 = por %p58, %p59
      %p61 = scmp.ne.s32.totalorder %s50, %s53
      %p62 = scmp.eq.s32.totalorder %s19, 2
      %p63 = por %p61, %p62
      %p64 = scmp.ne.s32.totalorder %s53, %s54
      %p65 = scmp.eq.s32.totalorder %s19, 0
      %p66 = por %p64, %p65
      %p67 = scmp.ne.s32.totalorder %s53, %s54
      %p68 = scmp.eq.s32.totalorder %s20, 2
      %p69 = por %p67, %p68
      %p71 = scmp.ne.s32.totalorder %s54, %s70
      %p72 = scmp.eq.s32.totalorder %s20, 0
      %p73 = por %p71, %p72
      %s75 = sadd.s32 %s74, 1
      %p78 = scmp.eq.s32.totalorder %s14, 2
      %p79 = scmp.ne.s32.totalorder %s74, %s76
      %p80 = scmp.eq.s32.totalorder %s14, 0
      %p81 = por %p79, %p80
      %p82 = scmp.ne.s32.totalorder %s74, %s76
      %p83 = scmp.eq.s32.totalorder %s19, 2
      %p84 = por %p82, %p83
      %p85 = scmp.ne.s32.totalorder %s76, %s77
      %p86 = scmp.eq.s32.totalorder %s19, 0
      %p87 = por %p85, %p86
      %p88 = scmp.ne.s32.totalorder %s76, %s77
      %p89 = scmp.eq.s32.totalorder %s20, 2
      %p90 = por %p88, %p89
      %p92 = scmp.ne.s32.totalorder %s77, %s91
      %p93 = scmp.eq.s32.totalorder %s20, 0
      %p94 = por %p92, %p93
      %p95 = scmp.le.s32.totalorder 1, %s14
      %p96 = scmp.lt.s32.totalorder %s14, 4
      %p97 = pnand %p95, %p96
      %p98 = pneg %p97
      // Predicated region
      $region9: #{tpu_custom_call.1} parent=5 // pred_check
        _
      $region10: #{tpu_custom_call.1} parent=5 // pred_check_branch
        %100 = sbr.rel (%p97) target = $region12
      $region11: #{tpu_custom_call.1} parent=5 // pred_region
        %s101 = ssub.s32 %s14, 1
      $region12: #{tpu_custom_call.1} parent=5 // pred_fallthru
        _
      %p102 = scmp.lt.s32.totalorder %s14, 3
      // Predicated region
      $region13: #{tpu_custom_call.1} parent=5 // pred_check
        %p103 = pneg %p102
      $region14: #{tpu_custom_call.1} parent=5 // pred_check_branch
        %105 = sbr.rel (%p103) target = $region16
      $region15: #{tpu_custom_call.1} parent=5 // pred_region
        // Predicated region
        $region17: #{tpu_custom_call.1} parent=15 // pred_check
          %p106 = pneg %p34
        $region18: #{tpu_custom_call.1} parent=15 // pred_check_branch
          %108 = sbr.rel (%p106) target = $region20
        $region19: #{tpu_custom_call.1} parent=15 // pred_region
          %s109 = sand.u32 %s24, 1
          %s110 = scalar_lea.sflag [#allocation5], %s109
          %s111 = sand.u32 %s24, 1
          %s112 = smul.addr %s111, 128
          %s113 = scalar_lea.vmem [#allocation4], %s112
          %s115 = ssub.s32 2048, 2048
          %116 = vsyncadd %s110, %s115
          %s117 = smul.addr %s14, 16
          %s118 = smul.addr %s117, 128
          %s119 = scalar_lea.hbm %s2, %s118
          %s120 = sshll.u32 %s113, 4
          %s121 = int_to_ptr.vmem [resolvable:$true] %s120
          %126 = dma.hbm_to_vmem [thread:$0]  %s119, 2048, %s121, %s110, 128, 128, 8
        $region20: #{tpu_custom_call.1} parent=15 // pred_fallthru
          _
        // Predicated region
        $region21: #{tpu_custom_call.1} parent=15 // pred_check
          %p127 = pneg %p60
        $region22: #{tpu_custom_call.1} parent=15 // pred_check_branch
          %129 = sbr.rel (%p127) target = $region24
        $region23: #{tpu_custom_call.1} parent=15 // pred_region
          %p130 = scmp.lt.s32.totalorder %s14, 2
          %s131 = scalar_select %p130, %s14, 2
          %s132 = scalar_lea.vmem %s3, %s131
        $region24: #{tpu_custom_call.1} parent=15 // pred_fallthru
          _
      $region16: #{tpu_custom_call.1} parent=5 // pred_fallthru
        _
      %p133 = scmp.le.s32.totalorder 1, %s14
      %p134 = scmp.lt.s32.totalorder %s14, 4
      %p135 = pnand %p133, %p134
      %p136 = pneg %p135
      // Predicated region
      $region25: #{tpu_custom_call.1} parent=5 // pred_check
        _
      $region26: #{tpu_custom_call.1} parent=5 // pred_check_branch
        %138 = sbr.rel (%p135) target = $region28
      $region27: #{tpu_custom_call.1} parent=5 // pred_region
        %s139 = ssub.s32 %s14, 1
        %s140 = sand.u32 %s27, 1
        %s141 = scalar_lea.sflag [#allocation5], %s140
        %s142 = sand.u32 %s27, 1
        %s143 = smul.addr %s142, 128
        %s144 = scalar_lea.vmem [#allocation4], %s143
        // Predicated region
        $region29: #{tpu_custom_call.1} parent=27 // pred_check
          %p145 = pneg %p40
        $region30: #{tpu_custom_call.1} parent=27 // pred_check_branch
          %147 = sbr.rel (%p145) target = $region32
        $region31: #{tpu_custom_call.1} parent=27 // pred_region
          %148 = dma.done %s141, 2048
        $region32: #{tpu_custom_call.1} parent=27 // pred_fallthru
          _
        %s149 = sand.u32 %s27, 1
        %s150 = scalar_lea.sflag [#allocation5], %s149
        %s151 = sand.u32 %s27, 1
        %s152 = smul.addr %s151, 128
        %s153 = scalar_lea.vmem [#allocation4], %s152
        %p154 = pneg %p40
        %p155 = pneg %p37
        %p156 = scmp.lt.s32.totalorder %s19, 2
        %s157 = scalar_select %p156, %s19, 2
        %s158 = scalar_lea.vmem %s3, %s157
        %p159 = pneg %p66
        %p160 = pneg %p63
        %p161 = pneg %p87
        %p162 = pneg %p84
        %p163 = scmp.lt.s32.totalorder %s19, 2
        %s164 = scalar_select %p163, %s19, 2
        %s165 = scalar_lea.vmem %s3, %s164
        %p166 = scmp.eq.s32.totalorder %s19, 0
        // Predicated region
        $region33: #{tpu_custom_call.1} parent=27 // pred_check
          %p167 = pneg %p166
        $region34: #{tpu_custom_call.1} parent=27 // pred_check_branch
          %169 = sbr.rel (%p167) target = $region36
        $region35: #{tpu_custom_call.1} parent=27 // pred_region
          // Predicated region
          $region37: #{tpu_custom_call.1} parent=35 // pred_check
            _
          $region38: #{tpu_custom_call.1} parent=35 // pred_check_branch
            %171 = sbr.rel target = $region40
          $region39: #{tpu_custom_call.1} parent=35 // pred_region
            %172 = sst [smem:[#allocation10]] [#allocation9]
            %173 = sst [smem:[#allocation11]] [#allocation8]
          $region40: #{tpu_custom_call.1} parent=35 // pred_fallthru
            _
          %175 = shalt.err (0)
          %s177 = sshll.u32 [#allocation2], 4
          %s178 = int_to_ptr.vmem [resolvable:$true] %s177
          %180 = dma.hbm_to_vmem [thread:$0]  %s0, 256, %s178, [#allocation3]
          %s181 = scalar_lea.sflag [#allocation3], 1
          // Predicated region
          $region41: #{tpu_custom_call.1} parent=35 // pred_check
            _
          $region42: #{tpu_custom_call.1} parent=35 // pred_check_branch
            %183 = sbr.rel target = $region44
          $region43: #{tpu_custom_call.1} parent=35 // pred_region
            %184 = sst [smem:[#allocation10]] [#allocation13]
            %185 = sst [smem:[#allocation11]] [#allocation12]
          $region44: #{tpu_custom_call.1} parent=35 // pred_fallthru
            _
          %187 = shalt.err (0)
          %s189 = sshll.u32 [#allocation7], 4
          %s190 = int_to_ptr.vmem [resolvable:$true] %s189
          %192 = dma.hbm_to_vmem [thread:$0]  %s1, 256, %s190, %s181
          %s193 = smul.u32 16, 1
          %s194 = sshll.u32 %s193, 4
          %195 = dma.done [#allocation3], %s194
          %s196 = sshll.u32 %s193, 4
          %197 = dma.done %s181, %s196
          %v198 = vld [vmem:[#allocation2] sm:$0xff]
          %v199 = vld [vmem:[#allocation2 + $0x8] sm:$0xff]
          %v200 = vlaneseq
          %v201 = vshrl.u32 %v200, 7
          %v202 = vadd.s32 %v201, 8
          %v203 = vlaneseq
          %v204 = vand.u32 %v203, 127
          %vm205 = vcmp.eq.s32.totalorder %v201, %v204
          %vm206 = vcmp.eq.s32.totalorder %v202, %v204
          %v207 = vsel %vm205, 1.0, %v198
          %v208 = vsel %vm206, 1.0, %v199
          %vm209 = vcmask 130048
          %v210 = vsel %vm209, %v207, 0.0
          %211 = vadd.xlane.f32.xlu0 %v210
          %v212 = vpop.xlane.xlu0 %211
          %v213 = vsel %vm209, %v208, 0.0
          %214 = vadd.xlane.f32.xlu0 %v213
          %v215 = vpop.xlane.xlu0 %214
          %v216 = vrsqrt.pop %v212
          %v217 = vrsqrt.pop %v215
          %v218 = vmul.f32 %v207, %v216
          %v219 = vmul.f32 %v208, %v217
          %220 = vxpose.xlu0.b32.start [1/16] %v216, 128
          %221 = vxpose.xlu0.b32.cont [2/16] %v217, 128
          %222 = vxpose.xlu0.b32.cont [3/16] 0.0, 128
          %223 = vxpose.xlu0.b32.cont [4/16] 0.0, 128
          %224 = vxpose.xlu0.b32.cont [5/16] 0.0, 128
          %225 = vxpose.xlu0.b32.cont [6/16] 0.0, 128
          %226 = vxpose.xlu0.b32.cont [7/16] 0.0, 128
          %227 = vxpose.xlu0.b32.cont [8/16] 0.0, 128
          %228 = vxpose.xlu0.b32.cont [9/16] 0.0, 128
          %229 = vxpose.xlu0.b32.cont [10/16] 0.0, 128
          %230 = vxpose.xlu0.b32.cont [11/16] 0.0, 128
          %231 = vxpose.xlu0.b32.cont [12/16] 0.0, 128
          %232 = vxpose.xlu0.b32.cont [13/16] 0.0, 128
          %233 = vxpose.xlu0.b32.cont [14/16] 0.0, 128
          %234 = vxpose.xlu0.b32.cont [15/16] 0.0, 128
          %235 = vxpose.xlu0.b32.end [16/16] 0.0, 128
          %v236 = vpop.trf.xlu0
          %v237 = vpop.trf.xlu0
          %v238 = vpop.trf.xlu0
          %v239 = vpop.trf.xlu0
          %v240 = vpop.trf.xlu0
          %v241 = vpop.trf.xlu0
          %v242 = vpop.trf.xlu0
          %v243 = vpop.trf.xlu0
          %v244 = vpop.trf.xlu0
          %v245 = vpop.trf.xlu0
          %v246 = vpop.trf.xlu0
          %v247 = vpop.trf.xlu0
          %v248 = vpop.trf.xlu0
          %v249 = vpop.trf.xlu0
          %v250 = vpop.trf.xlu0
          %v251 = vpop.trf.xlu0
          %v252 = vlaneseq
          %v253 = vshrl.u32 %v252, 7
          %v254 = vsub.s32 0, %v253
          %v255 = vrot.slane %v236, %v254
          %v256 = vmul.f32 %v218, %v255
          %v257 = vmul.f32 %v219, %v255
          %v258 = vsel %vm209, %v256, 0.0
          %v259 = vsel %vm209, %v257, 0.0
          %v260 = vadd.f32 %v258, %v259
          %v261 = vrot.slane %v260, 4
          %v262 = vadd.f32 %v260, %v261
          %v263 = vrot.slane %v262, 2
          %v264 = vadd.f32 %v262, %v263
          %v265 = vrot.slane %v264, 1
          %v266 = vadd.f32 %v264, %v265
          %v267 = vrsqrt.pop %v266
          %268 = vxpose.xlu0.b32.start [1/16] %v267, 128
          %269 = vxpose.xlu0.b32.cont [2/16] 0.0, 128
          %270 = vxpose.xlu0.b32.cont [3/16] 0.0, 128
          %271 = vxpose.xlu0.b32.cont [4/16] 0.0, 128
          %272 = vxpose.xlu0.b32.cont [5/16] 0.0, 128
          %273 = vxpose.xlu0.b32.cont [6/16] 0.0, 128
          %274 = vxpose.xlu0.b32.cont [7/16] 0.0, 128
          %275 = vxpose.xlu0.b32.cont [8/16] 0.0, 128
          %276 = vxpose.xlu0.b32.cont [9/16] 0.0, 128
          %277 = vxpose.xlu0.b32.cont [10/16] 0.0, 128
          %278 = vxpose.xlu0.b32.cont [11/16] 0.0, 128
          %279 = vxpose.xlu0.b32.cont [12/16] 0.0, 128
          %280 = vxpose.xlu0.b32.cont [13/16] 0.0, 128
          %281 = vxpose.xlu0.b32.cont [14/16] 0.0, 128
          %282 = vxpose.xlu0.b32.cont [15/16] 0.0, 128
          %283 = vxpose.xlu0.b32.end [16/16] 0.0, 128
          %v284 = vpop.trf.xlu0
          %v285 = vpop.trf.xlu0
          %v286 = vpop.trf.xlu0
          %v287 = vpop.trf.xlu0
          %v288 = vpop.trf.xlu0
          %v289 = vpop.trf.xlu0
          %v290 = vpop.trf.xlu0
          %v291 = vpop.trf.xlu0
          %v292 = vpop.trf.xlu0
          %v293 = vpop.trf.xlu0
          %v294 = vpop.trf.xlu0
          %v295 = vpop.trf.xlu0
          %v296 = vpop.trf.xlu0
          %v297 = vpop.trf.xlu0
          %v298 = vpop.trf.xlu0
          %v299 = vpop.trf.xlu0
          %301 = vset.pattern.permute.xlu0 0
          %302 = vperm.xlu0 %301, %v284
          %v303 = vpop.permute.xlu0 %302
          %306 = vset.pattern.permute.xlu0 0
          %307 = vperm.xlu0 %306, %v285
          %v308 = vpop.permute.xlu0 %307
          %v310 = vmul.f32 %v256, %v303
          %v311 = vmul.f32 %v257, %v308
          %v312 = vmul.f32 %v310, %v267
          %v313 = vmul.f32 %v311, %v267
          %314 = vst.msk [vmem:[#allocation2] sm:$0xff] %vm209, %v312
          %315 = vst.msk [vmem:[#allocation2 + $0x8] sm:$0xff] %vm209, %v313
        $region36: #{tpu_custom_call.1} parent=27 // pred_fallthru
          _
        %v316 = vld [vmem:[#allocation7] sm:$0xff]
        %v317 = vld [vmem:[#allocation7 + $0x8] sm:$0xff]
        %v318 = vld [vmem:[%s144] sm:$0xff]
        %v319 = vld [vmem:[%s144 + $0x8] sm:$0xff]
        %v320 = vld [vmem:[%s144 + $0x10] sm:$0xff]
        %v321 = vld [vmem:[%s144 + $0x18] sm:$0xff]
        %v322 = vld [vmem:[%s144 + $0x20] sm:$0xff]
        %v323 = vld [vmem:[%s144 + $0x28] sm:$0xff]
        %v324 = vld [vmem:[%s144 + $0x30] sm:$0xff]
        %v325 = vld [vmem:[%s144 + $0x38] sm:$0xff]
        %v326 = vld [vmem:[%s144 + $0x40] sm:$0xff]
        %v327 = vld [vmem:[%s144 + $0x48] sm:$0xff]
        %v328 = vld [vmem:[%s144 + $0x50] sm:$0xff]
        %v329 = vld [vmem:[%s144 + $0x58] sm:$0xff]
        %v330 = vld [vmem:[%s144 + $0x60] sm:$0xff]
        %v331 = vld [vmem:[%s144 + $0x68] sm:$0xff]
        %v332 = vld [vmem:[%s144 + $0x70] sm:$0xff]
        %v333 = vld [vmem:[%s144 + $0x78] sm:$0xff]
        %334 = vmatprep.subr.mxu0 0.0
        %335 = vmatpush1.msra.mxu0 %v318
        %336 = vmatprep.subr.mxu0 0.0
        %337 = vmatpush1.msra.mxu0 %v319
        %338 = vmatprep.subr.mxu0 0.0
        %339 = vmatpush1.msra.mxu0 %v320
        %340 = vmatprep.subr.mxu0 0.0
        %341 = vmatpush1.msra.mxu0 %v321
        %342 = vmatprep.subr.mxu0 0.0
        %343 = vmatpush1.msra.mxu0 %v322
        %344 = vmatprep.subr.mxu0 0.0
        %345 = vmatpush1.msra.mxu0 %v323
        %346 = vmatprep.subr.mxu0 0.0
        %347 = vmatpush1.msra.mxu0 %v324
        %348 = vmatprep.subr.mxu0 0.0
        %349 = vmatpush1.msra.mxu0 %v325
        %350 = vmatprep.subr.mxu0 0.0
        %351 = vmatpush1.msra.mxu0 %v326
        %352 = vmatprep.subr.mxu0 0.0
        %353 = vmatpush1.msra.mxu0 %v327
        %354 = vmatprep.subr.mxu0 0.0
        %355 = vmatpush1.msra.mxu0 %v328
        %356 = vmatprep.subr.mxu0 0.0
        %357 = vmatpush1.msra.mxu0 %v329
        %358 = vmatprep.subr.mxu0 0.0
        %359 = vmatpush1.msra.mxu0 %v330
        %360 = vmatprep.subr.mxu0 0.0
        %361 = vmatpush1.msra.mxu0 %v331
        %362 = vmatprep.subr.mxu0 0.0
        %363 = vmatpush1.msra.mxu0 %v332
        %364 = vmatprep.subr.mxu0 0.0
        %365 = vmatpush1.msra.mxu0 %v333
        %366 = vmatprep.subr.mxu0 0.0
        %367 = vmatpush1.msra.mxu0 0.0
        %368 = vmatprep.subr.mxu0 0.0
        %369 = vmatpush1.msra.mxu0 0.0
        %370 = vmatprep.subr.mxu0 0.0
        %371 = vmatpush1.msra.mxu0 0.0
        %372 = vmatprep.subr.mxu0 0.0
        %373 = vmatpush1.msra.mxu0 0.0
        %374 = vmatprep.subr.mxu0 0.0
        %375 = vmatpush1.msra.mxu0 0.0
        %376 = vmatprep.subr.mxu0 0.0
        %377 = vmatpush1.msra.mxu0 0.0
        %378 = vmatprep.subr.mxu0 0.0
        %379 = vmatpush1.msra.mxu0 0.0
        %380 = vmatprep.subr.mxu0 0.0
        %381 = vmatpush1.msra.mxu0 0.0
        %382 = vmatprep.subr.mxu0 0.0
        %383 = vmatpush1.msra.mxu0 0.0
        %384 = vmatprep.subr.mxu0 0.0
        %385 = vmatpush1.msra.mxu0 0.0
        %386 = vmatprep.subr.mxu0 0.0
        %387 = vmatpush1.msra.mxu0 0.0
        %388 = vmatprep.subr.mxu0 0.0
        %389 = vmatpush1.msra.mxu0 0.0
        %390 = vmatprep.subr.mxu0 0.0
        %391 = vmatpush1.msra.mxu0 0.0
        %392 = vmatprep.subr.mxu0 0.0
        %393 = vmatpush1.msra.mxu0 0.0
        %394 = vmatprep.subr.mxu0 0.0
        %395 = vmatpush1.msra.mxu0 0.0
        %396 = vmatprep.subr.mxu0 0.0
        %397 = vmatpush1.msra.mxu0 0.0
        %398 = vmatprep.mubr.f32.mxu0 0.0
        %399 = vmatmul.mubr.f32.gmra.mrb[0].mxu0 %v316
        %v400 = vpop.f32.mrb[0].mxu0
        %v401 = vadd.f32 0.0, %v400
        %v402 = vpop.f32.mrb[0].mxu0
        %403 = vmatprep.mubr.f32.mxu0 0.0
        %404 = vmatmul.mubr.f32.gmra.mrb[0].mxu0 %v317
        %v405 = vpop.f32.mrb[0].mxu0
        %v406 = vadd.f32 0.0, %v405
        %v407 = vpop.f32.mrb[0].mxu0
        %408 = vdwg.mxu0
        %v409 = vld [vmem:[#allocation2] sm:$0xff]
        %v410 = vld [vmem:[#allocation2 + $0x8] sm:$0xff]
        %v411 = vld [vmem:[%s165] sm:$0x1]
        %v413 = vlaneseq
        %v414 = vshrl.u32 %v413, 7
        %v415 = vsub.s32 0, %v414
        %v416 = vrot.slane %v411, %v415
        %vm418 = vcmask 130048
        %v420 = vsel %vm418, %v409, 0
        %v423 = vsel %vm418, %v410, 0
        %425 = vmatprep.subr.mxu0 0.0
        %426 = vmatpush1.msra.mxu0 %v401
        %427 = vmatprep.subr.mxu0 0.0
        %428 = vmatpush1.msra.mxu0 %v406
        %429 = vmatprep.subr.mxu0 0.0
        %430 = vmatpush1.msra.mxu0 0.0
        %431 = vmatprep.subr.mxu0 0.0
        %432 = vmatpush1.msra.mxu0 0.0
        %433 = vmatprep.subr.mxu0 0.0
        %434 = vmatpush1.msra.mxu0 0.0
        %435 = vmatprep.subr.mxu0 0.0
        %436 = vmatpush1.msra.mxu0 0.0
        %437 = vmatprep.subr.mxu0 0.0
        %438 = vmatpush1.msra.mxu0 0.0
        %439 = vmatprep.subr.mxu0 0.0
        %440 = vmatpush1.msra.mxu0 0.0
        %441 = vmatprep.subr.mxu0 0.0
        %442 = vmatpush1.msra.mxu0 0.0
        %443 = vmatprep.subr.mxu0 0.0
        %444 = vmatpush1.msra.mxu0 0.0
        %445 = vmatprep.subr.mxu0 0.0
        %446 = vmatpush1.msra.mxu0 0.0
        %447 = vmatprep.subr.mxu0 0.0
        %448 = vmatpush1.msra.mxu0 0.0
        %449 = vmatprep.subr.mxu0 0.0
        %450 = vmatpush1.msra.mxu0 0.0
        %451 = vmatprep.subr.mxu0 0.0
        %452 = vmatpush1.msra.mxu0 0.0
        %453 = vmatprep.subr.mxu0 0.0
        %454 = vmatpush1.msra.mxu0 0.0
        %455 = vmatprep.subr.mxu0 0.0
        %456 = vmatpush1.msra.mxu0 0.0
        %457 = vmatprep.subr.mxu0 0.0
        %458 = vmatpush1.msra.mxu0 0.0
        %459 = vmatprep.subr.mxu0 0.0
        %460 = vmatpush1.msra.mxu0 0.0
        %461 = vmatprep.subr.mxu0 0.0
        %462 = vmatpush1.msra.mxu0 0.0
        %463 = vmatprep.subr.mxu0 0.0
        %464 = vmatpush1.msra.mxu0 0.0
        %465 = vmatprep.subr.mxu0 0.0
        %466 = vmatpush1.msra.mxu0 0.0
        %467 = vmatprep.subr.mxu0 0.0
        %468 = vmatpush1.msra.mxu0 0.0
        %469 = vmatprep.subr.mxu0 0.0
        %470 = vmatpush1.msra.mxu0 0.0
        %471 = vmatprep.subr.mxu0 0.0
        %472 = vmatpush1.msra.mxu0 0.0
        %473 = vmatprep.subr.mxu0 0.0
        %474 = vmatpush1.msra.mxu0 0.0
        %475 = vmatprep.subr.mxu0 0.0
        %476 = vmatpush1.msra.mxu0 0.0
        %477 = vmatprep.subr.mxu0 0.0
        %478 = vmatpush1.msra.mxu0 0.0
        %479 = vmatprep.subr.mxu0 0.0
        %480 = vmatpush1.msra.mxu0 0.0
        %481 = vmatprep.subr.mxu0 0.0
        %482 = vmatpush1.msra.mxu0 0.0
        %483 = vmatprep.subr.mxu0 0.0
        %484 = vmatpush1.msra.mxu0 0.0
        %485 = vmatprep.subr.mxu0 0.0
        %486 = vmatpush1.msra.mxu0 0.0
        %487 = vmatprep.subr.mxu0 0.0
        %488 = vmatpush1.msra.mxu0 0.0
        %489 = vmatprep.mubr.f32.mxu0 0.0
        %490 = vmatmul.mubr.f32.gmra.mrb[0].mxu0 %v420
        %v491 = vpop.f32.mrb[0].mxu0
        %v492 = vadd.f32 %v416, %v491
        %v493 = vpop.f32.mrb[0].mxu0
        %494 = vmatprep.mubr.f32.mxu0 0.0
        %495 = vmatmul.mubr.f32.gmra.mrb[0].mxu0 %v423
        %v496 = vpop.f32.mrb[0].mxu0
        %v497 = vadd.f32 %v416, %v496
        %v498 = vpop.f32.mrb[0].mxu0
        %499 = vdwg.mxu0
        %v500 = vmax.f32 %v492, 0.0
        %v501 = vmax.f32 %v497, 0.0
        %502 = vst [vmem:[#allocation7] sm:$0xff] %v500
        %503 = vst [vmem:[#allocation7 + $0x8] sm:$0xff] %v501
        // Predicated region
        $region45: #{tpu_custom_call.1} parent=27 // pred_check
          %p504 = pneg %p84
        $region46: #{tpu_custom_call.1} parent=27 // pred_check_branch
          %506 = sbr.rel (%p504) target = $region48
        $region47: #{tpu_custom_call.1} parent=27 // pred_region
          %s508 = ssub.s32 256, 256
          %509 = vsyncadd [#allocation6], %s508
          %s510 = sshll.u32 [#allocation7], 4
          %s511 = int_to_ptr.vmem [resolvable:$true] %s510
          %516 = dma.vmem_to_hbm [thread:$0]  %s511, 256, %s4, [#allocation6], 128, 128, 8
        $region48: #{tpu_custom_call.1} parent=27 // pred_fallthru
          _
        // Predicated region
        $region49: #{tpu_custom_call.1} parent=27 // pred_check
          %p517 = pneg %p84
        $region50: #{tpu_custom_call.1} parent=27 // pred_check_branch
          %519 = sbr.rel (%p517) target = $region52
        $region51: #{tpu_custom_call.1} parent=27 // pred_region
          %520 = dma.done [#allocation6], 256
        $region52: #{tpu_custom_call.1} parent=27 // pred_fallthru
          _
      $region28: #{tpu_custom_call.1} parent=5 // pred_fallthru
        _
      %p521 = scmp.le.s32.totalorder 2, %s14
      // Predicated region
      $region53: #{tpu_custom_call.1} parent=5 // pred_check
        %p522 = pneg %p521
      $region54: #{tpu_custom_call.1} parent=5 // pred_check_branch
        %524 = sbr.rel (%p522) target = $region56
      $region55: #{tpu_custom_call.1} parent=5 // pred_region
        %s525 = ssub.s32 %s14, 2
      $region56: #{tpu_custom_call.1} parent=5 // pred_fallthru
        _
    $region6: #{tpu_custom_call.1} parent=1 // loop_footer
      %s18 = sadd.s32 1, %s14
    $region7: #{tpu_custom_call.1} parent=1 // loop_footer_branch
      %13 = sbr.rel target = $region3
    $region8: #{tpu_custom_call.1} parent=1 // loop_exit
      _
    %526 = vsyncpa [#allocation5], 1
    %s527 = scalar_lea.sflag [#allocation5], 1
    %528 = vsyncpa %s527, 1
    %529 = vsyncpa [#allocation6], 1
    %s530 = scalar_lea.sflag [#allocation6], 1
    %531 = vsyncpa %s530, 1
  %532 = vsyncmov [#allocation3]
  %s533 = vpop.sfrf %532
  %p534 = scmp.eq.s32.totalorder %s533, 0
  %p535 = pneg %p534
  %537 = shalt.err (%p535)
  %s538 = scalar_lea.sflag [#allocation3], 1
  %539 = vsyncmov %s538
  %s540 = vpop.sfrf %539
  %p541 = scmp.eq.s32.totalorder %s540, 0
  %p542 = pneg %p541
  %544 = shalt.err (%p542)

</llo_original>
